<compile_context>
chip_gen: v5e
topology: v5e:2x2
jax: 0.10.0
libtpu: 0.0.40
codegen_flags: <defaults>
</compile_context>

<pallas_src>
import functools
import math

import numpy as np
import jax
import jax.numpy as jnp
from jax import lax
from jax.experimental import pallas as pl
from jax.experimental.pallas import tpu as pltpu  # noqa: F401  (see pltpu.roll TODO below)

NEG_SLOPE = 0.2
MXU_DTYPE = jnp.bfloat16          # matmul operand dtype; accumulation stays f32


# ----------------------------------------------------------------------------
# in-kernel helpers (operate on VMEM values)
# ----------------------------------------------------------------------------
def _lrelu(v):
    return jnp.where(v >= 0, v, NEG_SLOPE * v)


def _mxu(a, b):
    """bf16 x bf16 MXU matmul with f32 accumulation."""
    return jnp.dot(a.astype(MXU_DTYPE), b.astype(MXU_DTYPE),
                   preferred_element_type=jnp.float32)


def _roll_lanes(x, delta):
    """y[:, p] = x[:, (p + delta) mod L] (wrap roll).

    Wrapped / cross-image reads are always zeroed by the caller's tap masks or
    never consumed (pool selection).  No zero-fill buffer is materialized.
    TODO(synk): on hardware pltpu.roll(x, (-delta) % L, axis=1) would move this
    to the XLU slot; a two-slice concat is kept for interpret-mode portability.
    """
    L = x.shape[-1]
    d = delta % L
    if d == 0:
        return x
    return jnp.concatenate([x[:, d:], x[:, :d]], axis=1)


def _conv3x3(x, masks, w, b, W, dil=1):
    """3x3 'same' conv (dilation dil) on lane-flattened, batch-folded images.

    x: (Cin, L) f32, masks: (9, L) f32 per-tap validity, w: (Cout, 9*Cin) bf16
    in (kh, kw, cin) order, b: (Cout, 1) f32.  Returns (Cout, L) f32.
    """
    taps = []
    for kh in range(3):
        for kw in range(3):
            t = kh * 3 + kw
            tap = _roll_lanes(x, (kh - 1) * dil * W + (kw - 1) * dil)
            if t != 4:                       # centre tap is always valid
                tap = tap * masks[t:t + 1, :]
            taps.append(tap)
    col = jnp.concatenate(taps, axis=0)      # im2col: (9*Cin, L)
    return _mxu(w, col) + b


def _scatter_max(x, s, W):
    """s x s max-pool; valid results live at flat positions (s*ho)*W + s*wo of
    each image block.  Other positions are never consumed (selection matrices
    have zero rows there), so wrap-around rolls are harmless."""
    if s == 1:
        return x
    mw = x
    for i in range(1, s):
        mw = jnp.maximum(mw, _roll_lanes(x, i))
    m = mw
    for j in range(1, s):
        m = jnp.maximum(m, _roll_lanes(mw, j * W))
    return m


def _msrb(x, masks, sels, ups, p, scales, C, W):
    """One MSRB at the (batch-folded) resolution of x.  p = (wf, bf, w1, b1, w2, b2)."""
    wf, bf, w1, b1, w2, b2 = p
    total = bf
    ui = 0
    for idx, s in enumerate(scales):
        wpart = wf[:, idx * C:(idx + 1) * C]
        if s == 1:                           # pool(1) + resize-to-same are identities
            total = total + _mxu(wpart, x)
        else:
            comp = _mxu(_scatter_max(x, s, W), sels[ui])       # compact pooled (C, L/s^2)
            total = total + _mxu(_mxu(wpart, comp), ups[ui])   # bilinear upsample matmul
            ui += 1
    fuse = _lrelu(total)
    c1 = _lrelu(_conv3x3(fuse, masks, w1, b1, W))
    c2 = _lrelu(_conv3x3(c1, masks, w2, b2, W))
    return c2 + x                            # fused residual add


# ----------------------------------------------------------------------------
# host-side precomputed constants: cached as NUMPY only (never traced values)
# ----------------------------------------------------------------------------
@functools.lru_cache(maxsize=None)
def _conv_masks_np(H, W, dil, N):
    S = H * W
    m = np.zeros((9, S), np.float32)
    hh, ww = np.meshgrid(np.arange(H), np.arange(W), indexing="ij")
    for kh in range(3):
        for kw in range(3):
            dh, dw = (kh - 1) * dil, (kw - 1) * dil
            valid = ((hh + dh >= 0) & (hh + dh < H) &
                     (ww + dw >= 0) & (ww + dw < W))
            m[kh * 3 + kw] = valid.reshape(S).astype(np.float32)
    return np.tile(m, (1, N))                # batch folded along lanes


@functools.lru_cache(maxsize=None)
def _interp_1d_np(out_size, in_size):
    """PyTorch bilinear, align_corners=False."""
    A = np.zeros((out_size, in_size), np.float32)
    if out_size == in_size:
        np.fill_diagonal(A, 1.0)
        return A
    scale = in_size / out_size
    for o in range(out_size):
        src = max((o + 0.5) * scale - 0.5, 0.0)
        i0 = min(int(np.floor(src)), in_size - 1)
        i1 = min(i0 + 1, in_size - 1)
        frac = src - i0
        A[o, i0] += 1.0 - frac
        A[o, i1] += frac
    return A


def _block_diag_np(block, N):
    r, c = block.shape
    out = np.zeros((N * r, N * c), np.float32)
    for n in range(N):
        out[n * r:(n + 1) * r, n * c:(n + 1) * c] = block
    return out


@functools.lru_cache(maxsize=None)
def _pool_sel_np(H, W, s, N):
    """(N*H*W, N*Ho*Wo) 0/1 matrix compacting scattered s x s max-pool results."""
    assert H % s == 0 and W % s == 0, "pooling scale must divide H and W"
    Ho, Wo = H // s, W // s
    P = np.zeros((H * W, Ho * Wo), np.float32)
    for ho in range(Ho):
        for wo in range(Wo):
            P[s * ho * W + s * wo, ho * Wo + wo] = 1.0
    return _block_diag_np(P, N)


@functools.lru_cache(maxsize=None)
def _up_T_np(Hin, Win, Hout, Wout, N):
    """(N*Hin*Win, N*Hout*Wout) right-multiply bilinear upsample (align_corners=False)."""
    A = np.kron(_interp_1d_np(Hout, Hin), _interp_1d_np(Wout, Win))   # (Sout, Sin)
    return _block_diag_np(np.ascontiguousarray(A.T), N)


def _bf16(a):
    """Fresh (never cached) bf16 device constant from a cached numpy array."""
    return jnp.asarray(a, dtype=MXU_DTYPE)


# ----------------------------------------------------------------------------
# fused kernel builders (gridless pallas_calls: whole arrays resident in VMEM)
# ----------------------------------------------------------------------------
@functools.lru_cache(maxsize=None)
def _build_head_msdc(Cin, Cm, H, W, N):
    L = N * H * W

    def kernel(x_ref, m1_ref, m2_ref, m3_ref,
               w1_ref, b1_ref, w2_ref, b2_ref, w3_ref, b3_ref,
               wf_ref, bf_ref, o_ref):
        x = x_ref[...]
        c1 = _lrelu(_conv3x3(x, m1_ref[...], w1_ref[...], b1_ref[...], W, dil=1))
        c2 = _lrelu(_conv3x3(x, m2_ref[...], w2_ref[...], b2_ref[...], W, dil=2))
        c3 = _lrelu(_conv3x3(x, m3_ref[...], w3_ref[...], b3_ref[...], W, dil=3))
        wf = wf_ref[...]
        # concat eliminated: conv1x1(concat) == sum of per-branch 1x1 matmuls
        out = (_mxu(wf[:, :Cm], c1) + _mxu(wf[:, Cm:2 * Cm], c2)
               + _mxu(wf[:, 2 * Cm:], c3) + bf_ref[...])
        o_ref[...] = out.astype(o_ref.dtype)

    return pl.pallas_call(kernel, out_shape=jax.ShapeDtypeStruct((Cm, L), jnp.float32))


@functools.lru_cache(maxsize=None)
def _build_head_plain(Cin, Cm, H, W, N):
    L = N * H * W

    def kernel(x_ref, m_ref, w_ref, b_ref, o_ref):
        o_ref[...] = _lrelu(_conv3x3(x_ref[...], m_ref[...], w_ref[...],
                                     b_ref[...], W)).astype(o_ref.dtype)

    return pl.pallas_call(kernel, out_shape=jax.ShapeDtypeStruct((Cm, L), jnp.float32))


@functools.lru_cache(maxsize=None)
def _build_msrb_block(C, H, W, N, scales, pool):
    """[optional fused 2x2 maxpool] + two MSRBs.  (H, W) is the post-pool resolution."""
    L = N * H * W
    n_up = sum(1 for s in scales if s > 1)
    Win = 2 * W if pool else W

    def kernel(*refs):
        it = iter(refs)
        x_ref = next(it)
        pool_sel_ref = next(it) if pool else None
        m_ref = next(it)
        sels = [next(it)[...] for _ in range(n_up)]
        ups = [next(it)[...] for _ in range(n_up)]
        pa = tuple(next(it)[...] for _ in range(6))
        pb = tuple(next(it)[...] for _ in range(6))
        o_ref = next(it)

        x = x_ref[...]
        if pool:                                        # fused stem 2x2 maxpool
            x = _mxu(_scatter_max(x, 2, Win), pool_sel_ref[...])
        masks = m_ref[...]
        y = _msrb(x, masks, sels, ups, pa, scales, C, W)
        y = _msrb(y, masks, sels, ups, pb, scales, C, W)
        o_ref[...] = y.astype(o_ref.dtype)

    return pl.pallas_call(kernel, out_shape=jax.ShapeDtypeStruct((C, L), jnp.float32))


@functools.lru_cache(maxsize=None)
def _build_dec_block(C, H, W, N, scales):
    """Decoder bridge (bilinear upsample + concat-1x1 + act) fused with two MSRBs."""
    L = N * H * W
    n_up = sum(1 for s in scales if s > 1)

    def kernel(*refs):
        it = iter(refs)
        xs_ref = next(it)                  # (C, N*Ss) low-res decoder input
        skip_ref = next(it)                # (C, L) encoder skip
        upb_ref = next(it)                 # (N*Ss, L) bridge upsample matrix
        wb_ref = next(it)
        bb_ref = next(it)
        m_ref = next(it)
        sels = [next(it)[...] for _ in range(n_up)]
        ups = [next(it)[...] for _ in range(n_up)]
        pa = tuple(next(it)[...] for _ in range(6))
        pb = tuple(next(it)[...] for _ in range(6))
        o_ref = next(it)

        up = _mxu(xs_ref[...], upb_ref[...])
        wb = wb_ref[...]
        # concat eliminated: 1x1 on [up, skip] == two partial matmuls
        t = _lrelu(_mxu(wb[:, :C], up) + _mxu(wb[:, C:], skip_ref[...]) + bb_ref[...])
        masks = m_ref[...]
        y = _msrb(t, masks, sels, ups, pa, scales, C, W)
        y = _msrb(y, masks, sels, ups, pb, scales, C, W)
        o_ref[...] = y.astype(o_ref.dtype)

    return pl.pallas_call(kernel, out_shape=jax.ShapeDtypeStruct((C, L), jnp.float32))


@functools.lru_cache(maxsize=None)
def _build_tail(C, Cout, H, W, N):
    L = N * H * W

    def kernel(x_ref, m_ref, w1_ref, b1_ref, w2_ref, b2_ref, o_ref):
        t = _lrelu(_conv3x3(x_ref[...], m_ref[...], w1_ref[...], b1_ref[...], W))
        o_ref[...] = (_mxu(w2_ref[...], t) + b2_ref[...]).astype(o_ref.dtype)

    return pl.pallas_call(kernel, out_shape=jax.ShapeDtypeStruct((Cout, L), jnp.float32))


# ----------------------------------------------------------------------------
# functional forward (mirrors the PyTorch modules)
# ----------------------------------------------------------------------------
def _msrb_params_flat(m):
    return (m["fuse"]["w"], m["fuse"]["b"], m["c1"]["w"], m["c1"]["b"],
            m["c2"]["w"], m["c2"]["b"])


def head_msdc_forward(p, x, H, W, N):
    Cin = x.shape[0]
    Cm = p["conv1"]["b"].shape[0]
    fn = _build_head_msdc(Cin, Cm, H, W, N)
    return fn(x,
              _conv_masks_np(H, W, 1, N), _conv_masks_np(H, W, 2, N),
              _conv_masks_np(H, W, 3, N),
              p["conv1"]["w"], p["conv1"]["b"],
              p["conv2"]["w"], p["conv2"]["b"],
              p["conv3"]["w"], p["conv3"]["b"],
              p["fusion"]["w"], p["fusion"]["b"])


def head_plain_forward(p, x, H, W, N):
    Cin = x.shape[0]
    Cm = p["b"].shape[0]
    return _build_head_plain(Cin, Cm, H, W, N)(x, _conv_masks_np(H, W, 1, N),
                                               p["w"], p["b"])


def msrb_block_forward(blk, x, Hin, Win, N, scales, pool):
    C = x.shape[0]
    scales = tuple(scales)
    H, W = (Hin // 2, Win // 2) if pool else (Hin, Win)
    args = [x]
    if pool:
        args.append(_bf16(_pool_sel_np(Hin, Win, 2, N)))
    args.append(_conv_masks_np(H, W, 1, N))
    for s in scales:
        if s > 1:
            args.append(_bf16(_pool_sel_np(H, W, s, N)))
    for s in scales:
        if s > 1:
            args.append(_bf16(_up_T_np(H // s, W // s, H, W, N)))
    args += list(_msrb_params_flat(blk[0])) + list(_msrb_params_flat(blk[1]))
    return _build_msrb_block(C, H, W, N, scales, pool)(*args)


def dec_block_forward(bridge_p, blk, x_small, hs, ws, skip, H, W, N, scales):
    C = skip.shape[0]
    scales = tuple(scales)
    args = [x_small, skip, _bf16(_up_T_np(hs, ws, H, W, N)),
            bridge_p["w"], bridge_p["b"], _conv_masks_np(H, W, 1, N)]
    for s in scales:
        if s > 1:
            args.append(_bf16(_pool_sel_np(H, W, s, N)))
    for s in scales:
        if s > 1:
            args.append(_bf16(_up_T_np(H // s, W // s, H, W, N)))
    args += list(_msrb_params_flat(blk[0])) + list(_msrb_params_flat(blk[1]))
    return _build_dec_block(C, H, W, N, scales)(*args)


def tail_forward(p, x, H, W, N):
    C = x.shape[0]
    Cout = p["tail2"]["b"].shape[0]
    return _build_tail(C, Cout, H, W, N)(x, _conv_masks_np(H, W, 1, N),
                                         p["tail1"]["w"], p["tail1"]["b"],
                                         p["tail2"]["w"], p["tail2"]["b"])


def stem_forward(p, x, H, W, N, scales):
    out = x
    h, w = H, W
    enc = []
    for i, blk in enumerate(p["encoder"]):
        pool = i != 0
        out = msrb_block_forward(blk, out, h, w, N, scales, pool)
        if pool:
            h, w = h // 2, w // 2
        enc.append((out, h, w))
    out = msrb_block_forward(p["bottleneck"], out, h, w, N, scales, True)
    h, w = h // 2, w // 2
    for blk, br in zip(p["decoder"], p["bridges"]):
        skip, sh, sw = enc.pop()
        out = dec_block_forward(br, blk, out, h, w, skip, sh, sw, N, scales)
        h, w = sh, sw
    return out, h, w


def _fold(x_nchw):
    """(N, C, H, W) -> (C, N*H*W): batch folded onto the lane axis."""
    N, C, H, W = x_nchw.shape
    return jnp.transpose(x_nchw, (1, 0, 2, 3)).reshape(C, N * H * W)


def _unfold(x, N, H, W):
    C = x.shape[0]
    return jnp.transpose(x.reshape(C, N, H, W), (1, 0, 2, 3))


def subnet_forward(p, x_nchw, *, scales, use_msdc):
    N, Cin, H, W = x_nchw.shape
    x = _fold(x_nchw.astype(jnp.float32))
    cin_pad = -Cin % 8
    if cin_pad:                               # pad head channels -> aligned im2col
        x = jnp.concatenate([x, jnp.zeros((cin_pad, N * H * W), x.dtype)], axis=0)
    if use_msdc:
        out = head_msdc_forward(p["head"], x, H, W, N)
    else:
        out = head_plain_forward(p["head"], x, H, W, N)
    out, h, w = stem_forward(p["stem"], out, H, W, N, scales)
    out = tail_forward(p, out, h, w, N)
    Cout = p["tail2"]["b"].shape[0]
    return _unfold(out, N, h, w).reshape(N, Cout, h, w)


# ----------------------------------------------------------------------------
# deterministic synthetic parameters (shapes match the PyTorch module)
# ----------------------------------------------------------------------------
class _KeyGen:
    def __init__(self, seed):
        self.key = jax.random.PRNGKey(seed)

    def __call__(self):
        self.key, sub = jax.random.split(self.key)
        return sub


def _flatten_w(w_hwio, cin_pad=None):
    """HWIO conv weight -> (Cout, K*K*Cin_pad) in (kh, kw, cin) tap order, bf16."""
    K, _, cin, cout = w_hwio.shape
    cin_p = cin if cin_pad is None else cin_pad
    w = jnp.asarray(w_hwio, jnp.float32)
    if cin_p != cin:
        w = jnp.concatenate([w, jnp.zeros((K, K, cin_p - cin, cout), jnp.float32)], axis=2)
    if K == 1:
        return jnp.transpose(w[0, 0], (1, 0)).astype(MXU_DTYPE)
    return jnp.transpose(w, (3, 0, 1, 2)).reshape(cout, K * K * cin_p).astype(MXU_DTYPE)


def conv_init(kg, cin, cout, k, cin_pad=None):
    fan_in = cin * k * k
    w = jax.random.normal(kg(), (k, k, cin, cout), jnp.float32) / math.sqrt(fan_in)
    b = jax.random.normal(kg(), (cout,), jnp.float32) * 0.01
    return {"w": _flatten_w(w, cin_pad), "b": b.reshape(cout, 1)}


def init_msrb(kg, planes, scales):
    return {"fuse": conv_init(kg, len(scales) * planes, planes, 1),
            "c1": conv_init(kg, planes, planes, 3),
            "c2": conv_init(kg, planes, planes, 3)}


def init_stem(kg, planes, scales, depth):
    ne = depth // 2
    return {"encoder": [[init_msrb(kg, planes, scales) for _ in range(2)] for _ in range(ne)],
            "bottleneck": [init_msrb(kg, planes, scales) for _ in range(2)],
            "decoder": [[init_msrb(kg, planes, scales) for _ in range(2)] for _ in range(ne)],
            "bridges": [conv_init(kg, 2 * planes, planes, 1) for _ in range(ne)]}


def init_subnet(seed, cin, cout, mid, depth, scales, use_msdc):
    assert depth % 2 == 1, "depth should be odd"
    kg = _KeyGen(seed)
    cin_p = cin + (-cin % 8)
    p = {}
    if use_msdc:
        p["head"] = {"conv1": conv_init(kg, cin, mid, 3, cin_p),
                     "conv2": conv_init(kg, cin, mid, 3, cin_p),
                     "conv3": conv_init(kg, cin, mid, 3, cin_p),
                     "fusion": conv_init(kg, 3 * mid, mid, 1)}
    else:
        p["head"] = conv_init(kg, cin, mid, 3, cin_p)
    p["stem"] = init_stem(kg, mid, scales, depth)
    p["tail1"] = conv_init(kg, mid, mid, 3)
    p["tail2"] = conv_init(kg, mid, cout, 1)
    return p


# ----------------------------------------------------------------------------
# pure-XLA references for unit tests
# ----------------------------------------------------------------------------
def _ref_conv(x, w, b, dil=1, pad=None):
    pad = dil if pad is None else pad
    y = lax.conv_general_dilated(x, w, (1, 1), [(pad, pad), (pad, pad)],
                                 rhs_dilation=(dil, dil),
                                 dimension_numbers=("NCHW", "HWIO", "NCHW"))
    return y + b.reshape(1, -1, 1, 1)


def _ref_upsample(x, H, W):
    N, C, Hi, Wi = x.shape
    A = jnp.asarray(np.kron(_interp_1d_np(H, Hi), _interp_1d_np(W, Wi)))
    return jnp.einsum("pq,ncq->ncp", A, x.reshape(N, C, Hi * Wi)).reshape(N, C, H, W)


def _ref_msrb(x, raw, scales):
    N, C, H, W = x.shape
    feats = []
    for s in scales:
        if s == 1:
            feats.append(x)
        else:
            pooled = lax.reduce_window(x, -jnp.inf, lax.max,
                                       (1, 1, s, s), (1, 1, s, s), "VALID")
            feats.append(_ref_upsample(pooled, H, W))
    t = _lrelu(_ref_conv(jnp.concatenate(feats, 1), raw["fuse"][0], raw["fuse"][1], pad=0))
    t = _lrelu(_ref_conv(t, raw["c1"][0], raw["c1"][1]))
    t = _lrelu(_ref_conv(t, raw["c2"][0], raw["c2"][1]))
    return t + x


def _rand_conv(kg, cin, cout, k):
    w = jax.random.normal(kg(), (k, k, cin, cout), jnp.float32) / math.sqrt(cin * k * k)
    b = jax.random.normal(kg(), (cout,), jnp.float32) * 0.1
    return w, b


def _rand_msrb(kg, planes, scales):
    raw = {"fuse": _rand_conv(kg, len(scales) * planes, planes, 1),
           "c1": _rand_conv(kg, planes, planes, 3),
           "c2": _rand_conv(kg, planes, planes, 3)}
    kern = {k: {"w": _flatten_w(v[0]), "b": v[1].reshape(-1, 1)} for k, v in raw.items()}
    return raw, kern


# ----------------------------------------------------------------------------
if __name__ == "__main__":
    IN_C, OUT_C, MID_C, DEPTH = 3, 3, 8, 3
    SCALES = (1, 2)
    N, H, W = 2, 16, 16
    S = H * W

    kg = _KeyGen(42)

    # ---- 1) fused MSDC head kernel vs XLA conv reference --------------------
    raw_head = {"conv1": _rand_conv(kg, IN_C, MID_C, 3),
                "conv2": _rand_conv(kg, IN_C, MID_C, 3),
                "conv3": _rand_conv(kg, IN_C, MID_C, 3),
                "fusion": _rand_conv(kg, 3 * MID_C, MID_C, 1)}
    head_p = {n: {"w": _flatten_w(v[0], 8 if n != "fusion" else None),
                  "b": v[1].reshape(-1, 1)} for n, v in raw_head.items()}
    xh = jax.random.normal(kg(), (N, IN_C, H, W), jnp.float32)
    xf = jnp.concatenate([_fold(xh), jnp.zeros((8 - IN_C, N * S), jnp.float32)], 0)
    got = _unfold(head_msdc_forward(head_p, xf, H, W, N), N, H, W)
    c1 = _lrelu(_ref_conv(xh, *raw_head["conv1"], dil=1))
    c2 = _lrelu(_ref_conv(xh, *raw_head["conv2"], dil=2))
    c3 = _lrelu(_ref_conv(xh, *raw_head["conv3"], dil=3))
    ref = _ref_conv(jnp.concatenate([c1, c2, c3], 1), *raw_head["fusion"], pad=0)
    np.testing.assert_allclose(np.asarray(got), np.asarray(ref), rtol=5e-2, atol=5e-2)

    # ---- 2) fused bottleneck block (2x2 maxpool + 2 MSRBs) -------------------
    raw_a, kern_a = _rand_msrb(kg, MID_C, SCALES)
    raw_b, kern_b = _rand_msrb(kg, MID_C, SCALES)
    xm = jax.random.normal(kg(), (N, MID_C, H, W), jnp.float32)
    got = msrb_block_forward([kern_a, kern_b], _fold(xm), H, W, N, SCALES, pool=True)
    got = _unfold(got, N, H // 2, W // 2)
    pooled = lax.reduce_window(xm, -jnp.inf, lax.max, (1, 1, 2, 2), (1, 1, 2, 2), "VALID")
    ref = _ref_msrb(_ref_msrb(pooled, raw_a, SCALES), raw_b, SCALES)
    np.testing.assert_allclose(np.asarray(got), np.asarray(ref), rtol=6e-2, atol=6e-2)

    # ---- 3) fused decoder block (bridge + 2 MSRBs) ---------------------------
    raw_c, kern_c = _rand_msrb(kg, MID_C, SCALES)
    raw_d, kern_d = _rand_msrb(kg, MID_C, SCALES)
    wb, bb = _rand_conv(kg, 2 * MID_C, MID_C, 1)
    br_p = {"w": _flatten_w(wb), "b": bb.reshape(-1, 1)}
    Hs, Ws = H // 2, W // 2
    xs = jax.random.normal(kg(), (N, MID_C, Hs, Ws), jnp.float32)
    sk = jax.random.normal(kg(), (N, MID_C, H, W), jnp.float32)
    got = dec_block_forward(br_p, [kern_c, kern_d], _fold(xs), Hs, Ws,
                            _fold(sk), H, W, N, SCALES)
    got = _unfold(got, N, H, W)
    up = _ref_upsample(xs, H, W)
    t = _lrelu(_ref_conv(jnp.concatenate([up, sk], 1), wb, bb, pad=0))
    ref = _ref_msrb(_ref_msrb(t, raw_c, SCALES), raw_d, SCALES)
    np.testing.assert_allclose(np.asarray(got), np.asarray(ref), rtol=6e-2, atol=6e-2)

    # ---- 4) full Subnet forward (NCHW in / NCHW out), both head variants -----
    x = jax.random.normal(jax.random.PRNGKey(0), (N, IN_C, H, W), jnp.float32)
    params = init_subnet(0, IN_C, OUT_C, MID_C, DEPTH, SCALES, True)
    fwd = jax.jit(functools.partial(subnet_forward, scales=SCALES, use_msdc=True))
    y = jax.block_until_ready(fwd(params, x))
    assert y.shape == (N, OUT_C, H, W)
    assert bool(jnp.all(jnp.isfinite(y)))

    # non-MSDC head, eager path (regression for the cached-constant tracer leak)
    params2 = init_subnet(1, IN_C, OUT_C, MID_C, DEPTH, SCALES, False)
    y2 = jax.block_until_ready(subnet_forward(params2, x, scales=SCALES, use_msdc=False))
    assert y2.shape == (N, OUT_C, H, W)
    assert bool(jnp.all(jnp.isfinite(y2)))

    print("KERNEL_OK")
</pallas_src>

<mosaic_0001>
module attributes {stable_mosaic.version = 11 : i64} {
  func.func @kernel(%arg0: memref<8x512xf32, #tpu.memory_space<vmem>>, %arg1: memref<9x512xf32, #tpu.memory_space<vmem>>, %arg2: memref<9x512xf32, #tpu.memory_space<vmem>>, %arg3: memref<9x512xf32, #tpu.memory_space<vmem>>, %arg4: memref<8x72xbf16, #tpu.memory_space<vmem>>, %arg5: memref<8x1xf32, #tpu.memory_space<vmem>>, %arg6: memref<8x72xbf16, #tpu.memory_space<vmem>>, %arg7: memref<8x1xf32, #tpu.memory_space<vmem>>, %arg8: memref<8x72xbf16, #tpu.memory_space<vmem>>, %arg9: memref<8x1xf32, #tpu.memory_space<vmem>>, %arg10: memref<8x24xbf16, #tpu.memory_space<vmem>>, %arg11: memref<8x1xf32, #tpu.memory_space<vmem>>, %arg12: memref<8x512xf32, #tpu.memory_space<vmem>>) attributes {dimension_semantics = [], scalar_prefetch = 0 : i64, scratch_operands = 0 : i64, tpu.core_type = #tpu.core_type<tc>} {
    %c0 = arith.constant 0 : index
    %c0_0 = arith.constant 0 : index
    %0 = vector.load %arg0[%c0, %c0_0] : memref<8x512xf32, #tpu.memory_space<vmem>>, vector<8x512xf32>
    %c0_1 = arith.constant 0 : index
    %c0_2 = arith.constant 0 : index
    %1 = vector.load %arg1[%c0_1, %c0_2] : memref<9x512xf32, #tpu.memory_space<vmem>>, vector<9x512xf32>
    %c0_3 = arith.constant 0 : index
    %c0_4 = arith.constant 0 : index
    %2 = vector.load %arg4[%c0_3, %c0_4] : memref<8x72xbf16, #tpu.memory_space<vmem>>, vector<8x72xbf16>
    %c0_5 = arith.constant 0 : index
    %c0_6 = arith.constant 0 : index
    %3 = vector.load %arg5[%c0_5, %c0_6] : memref<8x1xf32, #tpu.memory_space<vmem>>, vector<8x1xf32>
    %4 = vector.extract_strided_slice %0 {offsets = [0, 495], sizes = [8, 17], strides = [1, 1]} : vector<8x512xf32> to vector<8x17xf32>
    %5 = vector.extract_strided_slice %0 {offsets = [0, 0], sizes = [8, 495], strides = [1, 1]} : vector<8x512xf32> to vector<8x495xf32>
    %6 = tpu.concatenate %4, %5 in 1 : vector<8x17xf32>, vector<8x495xf32> -> vector<8x512xf32>
    %7 = vector.extract_strided_slice %1 {offsets = [0, 0], sizes = [1, 512], strides = [1, 1]} : vector<9x512xf32> to vector<1x512xf32>
    %8 = vector.broadcast %7 : vector<1x512xf32> to vector<8x512xf32>
    %9 = arith.mulf %6, %8 : vector<8x512xf32>
    %10 = vector.extract_strided_slice %0 {offsets = [0, 496], sizes = [8, 16], strides = [1, 1]} : vector<8x512xf32> to vector<8x16xf32>
    %11 = vector.extract_strided_slice %0 {offsets = [0, 0], sizes = [8, 496], strides = [1, 1]} : vector<8x512xf32> to vector<8x496xf32>
    %12 = tpu.concatenate %10, %11 in 1 : vector<8x16xf32>, vector<8x496xf32> -> vector<8x512xf32>
    %13 = vector.extract_strided_slice %1 {offsets = [1, 0], sizes = [1, 512], strides = [1, 1]} : vector<9x512xf32> to vector<1x512xf32>
    %14 = vector.broadcast %13 : vector<1x512xf32> to vector<8x512xf32>
    %15 = arith.mulf %12, %14 : vector<8x512xf32>
    %16 = vector.extract_strided_slice %0 {offsets = [0, 497], sizes = [8, 15], strides = [1, 1]} : vector<8x512xf32> to vector<8x15xf32>
    %17 = vector.extract_strided_slice %0 {offsets = [0, 0], sizes = [8, 497], strides = [1, 1]} : vector<8x512xf32> to vector<8x497xf32>
    %18 = tpu.concatenate %16, %17 in 1 : vector<8x15xf32>, vector<8x497xf32> -> vector<8x512xf32>
    %19 = vector.extract_strided_slice %1 {offsets = [2, 0], sizes = [1, 512], strides = [1, 1]} : vector<9x512xf32> to vector<1x512xf32>
    %20 = vector.broadcast %19 : vector<1x512xf32> to vector<8x512xf32>
    %21 = arith.mulf %18, %20 : vector<8x512xf32>
    %22 = vector.extract_strided_slice %0 {offsets = [0, 511], sizes = [8, 1], strides = [1, 1]} : vector<8x512xf32> to vector<8x1xf32>
    %23 = vector.extract_strided_slice %0 {offsets = [0, 0], sizes = [8, 511], strides = [1, 1]} : vector<8x512xf32> to vector<8x511xf32>
    %24 = tpu.concatenate %22, %23 in 1 : vector<8x1xf32>, vector<8x511xf32> -> vector<8x512xf32>
    %25 = vector.extract_strided_slice %1 {offsets = [3, 0], sizes = [1, 512], strides = [1, 1]} : vector<9x512xf32> to vector<1x512xf32>
    %26 = vector.broadcast %25 : vector<1x512xf32> to vector<8x512xf32>
    %27 = arith.mulf %24, %26 : vector<8x512xf32>
    %28 = vector.extract_strided_slice %0 {offsets = [0, 1], sizes = [8, 511], strides = [1, 1]} : vector<8x512xf32> to vector<8x511xf32>
    %29 = vector.extract_strided_slice %0 {offsets = [0, 0], sizes = [8, 1], strides = [1, 1]} : vector<8x512xf32> to vector<8x1xf32>
    %30 = tpu.concatenate %28, %29 in 1 : vector<8x511xf32>, vector<8x1xf32> -> vector<8x512xf32>
    %31 = vector.extract_strided_slice %1 {offsets = [5, 0], sizes = [1, 512], strides = [1, 1]} : vector<9x512xf32> to vector<1x512xf32>
    %32 = vector.broadcast %31 : vector<1x512xf32> to vector<8x512xf32>
    %33 = arith.mulf %30, %32 : vector<8x512xf32>
    %34 = vector.extract_strided_slice %0 {offsets = [0, 15], sizes = [8, 497], strides = [1, 1]} : vector<8x512xf32> to vector<8x497xf32>
    %35 = vector.extract_strided_slice %0 {offsets = [0, 0], sizes = [8, 15], strides = [1, 1]} : vector<8x512xf32> to vector<8x15xf32>
    %36 = tpu.concatenate %34, %35 in 1 : vector<8x497xf32>, vector<8x15xf32> -> vector<8x512xf32>
    %37 = vector.extract_strided_slice %1 {offsets = [6, 0], sizes = [1, 512], strides = [1, 1]} : vector<9x512xf32> to vector<1x512xf32>
    %38 = vector.broadcast %37 : vector<1x512xf32> to vector<8x512xf32>
    %39 = arith.mulf %36, %38 : vector<8x512xf32>
    %40 = vector.extract_strided_slice %0 {offsets = [0, 16], sizes = [8, 496], strides = [1, 1]} : vector<8x512xf32> to vector<8x496xf32>
    %41 = vector.extract_strided_slice %0 {offsets = [0, 0], sizes = [8, 16], strides = [1, 1]} : vector<8x512xf32> to vector<8x16xf32>
    %42 = tpu.concatenate %40, %41 in 1 : vector<8x496xf32>, vector<8x16xf32> -> vector<8x512xf32>
    %43 = vector.extract_strided_slice %1 {offsets = [7, 0], sizes = [1, 512], strides = [1, 1]} : vector<9x512xf32> to vector<1x512xf32>
    %44 = vector.broadcast %43 : vector<1x512xf32> to vector<8x512xf32>
    %45 = arith.mulf %42, %44 : vector<8x512xf32>
    %46 = vector.extract_strided_slice %0 {offsets = [0, 17], sizes = [8, 495], strides = [1, 1]} : vector<8x512xf32> to vector<8x495xf32>
    %47 = vector.extract_strided_slice %0 {offsets = [0, 0], sizes = [8, 17], strides = [1, 1]} : vector<8x512xf32> to vector<8x17xf32>
    %48 = tpu.concatenate %46, %47 in 1 : vector<8x495xf32>, vector<8x17xf32> -> vector<8x512xf32>
    %49 = vector.extract_strided_slice %1 {offsets = [8, 0], sizes = [1, 512], strides = [1, 1]} : vector<9x512xf32> to vector<1x512xf32>
    %50 = vector.broadcast %49 : vector<1x512xf32> to vector<8x512xf32>
    %51 = arith.mulf %48, %50 : vector<8x512xf32>
    %52 = tpu.concatenate %9, %15, %21, %27, %0, %33, %39, %45, %51 in 0 : vector<8x512xf32>, vector<8x512xf32>, vector<8x512xf32>, vector<8x512xf32>, vector<8x512xf32>, vector<8x512xf32>, vector<8x512xf32>, vector<8x512xf32>, vector<8x512xf32> -> vector<72x512xf32>
    %53 = arith.truncf %52 : vector<72x512xf32> to vector<72x512xbf16>
    %cst = arith.constant dense<0.000000e+00> : vector<8x512xf32>
    %54 = tpu.matmul %2, %53, %cst {dimension_numbers = #tpu.dot_dimension_numbers<[1], [0], [0], [1], [0, 0, 1, 1], [], []>} : vector<8x72xbf16>, vector<72x512xbf16>, vector<8x512xf32> -> vector<8x512xf32>
    %55 = vector.broadcast %3 : vector<8x1xf32> to vector<8x512xf32>
    %56 = arith.addf %54, %55 : vector<8x512xf32>
    %cst_7 = arith.constant 0.000000e+00 : f32
    %57 = vector.broadcast %cst_7 : f32 to vector<8x512xf32>
    %58 = arith.cmpf oge, %56, %57 : vector<8x512xf32>
    %cst_8 = arith.constant 2.000000e-01 : f32
    %59 = vector.broadcast %cst_8 : f32 to vector<8x512xf32>
    %60 = arith.mulf %59, %56 : vector<8x512xf32>
    %61 = arith.select %58, %56, %60 : vector<8x512xi1>, vector<8x512xf32>
    %c0_9 = arith.constant 0 : index
    %c0_10 = arith.constant 0 : index
    %62 = vector.load %arg2[%c0_9, %c0_10] : memref<9x512xf32, #tpu.memory_space<vmem>>, vector<9x512xf32>
    %c0_11 = arith.constant 0 : index
    %c0_12 = arith.constant 0 : index
    %63 = vector.load %arg6[%c0_11, %c0_12] : memref<8x72xbf16, #tpu.memory_space<vmem>>, vector<8x72xbf16>
    %c0_13 = arith.constant 0 : index
    %c0_14 = arith.constant 0 : index
    %64 = vector.load %arg7[%c0_13, %c0_14] : memref<8x1xf32, #tpu.memory_space<vmem>>, vector<8x1xf32>
    %65 = vector.extract_strided_slice %0 {offsets = [0, 478], sizes = [8, 34], strides = [1, 1]} : vector<8x512xf32> to vector<8x34xf32>
    %66 = vector.extract_strided_slice %0 {offsets = [0, 0], sizes = [8, 478], strides = [1, 1]} : vector<8x512xf32> to vector<8x478xf32>
    %67 = tpu.concatenate %65, %66 in 1 : vector<8x34xf32>, vector<8x478xf32> -> vector<8x512xf32>
    %68 = vector.extract_strided_slice %62 {offsets = [0, 0], sizes = [1, 512], strides = [1, 1]} : vector<9x512xf32> to vector<1x512xf32>
    %69 = vector.broadcast %68 : vector<1x512xf32> to vector<8x512xf32>
    %70 = arith.mulf %67, %69 : vector<8x512xf32>
    %71 = vector.extract_strided_slice %0 {offsets = [0, 480], sizes = [8, 32], strides = [1, 1]} : vector<8x512xf32> to vector<8x32xf32>
    %72 = vector.extract_strided_slice %0 {offsets = [0, 0], sizes = [8, 480], strides = [1, 1]} : vector<8x512xf32> to vector<8x480xf32>
    %73 = tpu.concatenate %71, %72 in 1 : vector<8x32xf32>, vector<8x480xf32> -> vector<8x512xf32>
    %74 = vector.extract_strided_slice %62 {offsets = [1, 0], sizes = [1, 512], strides = [1, 1]} : vector<9x512xf32> to vector<1x512xf32>
    %75 = vector.broadcast %74 : vector<1x512xf32> to vector<8x512xf32>
    %76 = arith.mulf %73, %75 : vector<8x512xf32>
    %77 = vector.extract_strided_slice %0 {offsets = [0, 482], sizes = [8, 30], strides = [1, 1]} : vector<8x512xf32> to vector<8x30xf32>
    %78 = vector.extract_strided_slice %0 {offsets = [0, 0], sizes = [8, 482], strides = [1, 1]} : vector<8x512xf32> to vector<8x482xf32>
    %79 = tpu.concatenate %77, %78 in 1 : vector<8x30xf32>, vector<8x482xf32> -> vector<8x512xf32>
    %80 = vector.extract_strided_slice %62 {offsets = [2, 0], sizes = [1, 512], strides = [1, 1]} : vector<9x512xf32> to vector<1x512xf32>
    %81 = vector.broadcast %80 : vector<1x512xf32> to vector<8x512xf32>
    %82 = arith.mulf %79, %81 : vector<8x512xf32>
    %83 = vector.extract_strided_slice %0 {offsets = [0, 510], sizes = [8, 2], strides = [1, 1]} : vector<8x512xf32> to vector<8x2xf32>
    %84 = vector.extract_strided_slice %0 {offsets = [0, 0], sizes = [8, 510], strides = [1, 1]} : vector<8x512xf32> to vector<8x510xf32>
    %85 = tpu.concatenate %83, %84 in 1 : vector<8x2xf32>, vector<8x510xf32> -> vector<8x512xf32>
    %86 = vector.extract_strided_slice %62 {offsets = [3, 0], sizes = [1, 512], strides = [1, 1]} : vector<9x512xf32> to vector<1x512xf32>
    %87 = vector.broadcast %86 : vector<1x512xf32> to vector<8x512xf32>
    %88 = arith.mulf %85, %87 : vector<8x512xf32>
    %89 = vector.extract_strided_slice %0 {offsets = [0, 2], sizes = [8, 510], strides = [1, 1]} : vector<8x512xf32> to vector<8x510xf32>
    %90 = vector.extract_strided_slice %0 {offsets = [0, 0], sizes = [8, 2], strides = [1, 1]} : vector<8x512xf32> to vector<8x2xf32>
    %91 = tpu.concatenate %89, %90 in 1 : vector<8x510xf32>, vector<8x2xf32> -> vector<8x512xf32>
    %92 = vector.extract_strided_slice %62 {offsets = [5, 0], sizes = [1, 512], strides = [1, 1]} : vector<9x512xf32> to vector<1x512xf32>
    %93 = vector.broadcast %92 : vector<1x512xf32> to vector<8x512xf32>
    %94 = arith.mulf %91, %93 : vector<8x512xf32>
    %95 = vector.extract_strided_slice %0 {offsets = [0, 30], sizes = [8, 482], strides = [1, 1]} : vector<8x512xf32> to vector<8x482xf32>
    %96 = vector.extract_strided_slice %0 {offsets = [0, 0], sizes = [8, 30], strides = [1, 1]} : vector<8x512xf32> to vector<8x30xf32>
    %97 = tpu.concatenate %95, %96 in 1 : vector<8x482xf32>, vector<8x30xf32> -> vector<8x512xf32>
    %98 = vector.extract_strided_slice %62 {offsets = [6, 0], sizes = [1, 512], strides = [1, 1]} : vector<9x512xf32> to vector<1x512xf32>
    %99 = vector.broadcast %98 : vector<1x512xf32> to vector<8x512xf32>
    %100 = arith.mulf %97, %99 : vector<8x512xf32>
    %101 = vector.extract_strided_slice %0 {offsets = [0, 32], sizes = [8, 480], strides = [1, 1]} : vector<8x512xf32> to vector<8x480xf32>
    %102 = vector.extract_strided_slice %0 {offsets = [0, 0], sizes = [8, 32], strides = [1, 1]} : vector<8x512xf32> to vector<8x32xf32>
    %103 = tpu.concatenate %101, %102 in 1 : vector<8x480xf32>, vector<8x32xf32> -> vector<8x512xf32>
    %104 = vector.extract_strided_slice %62 {offsets = [7, 0], sizes = [1, 512], strides = [1, 1]} : vector<9x512xf32> to vector<1x512xf32>
    %105 = vector.broadcast %104 : vector<1x512xf32> to vector<8x512xf32>
    %106 = arith.mulf %103, %105 : vector<8x512xf32>
    %107 = vector.extract_strided_slice %0 {offsets = [0, 34], sizes = [8, 478], strides = [1, 1]} : vector<8x512xf32> to vector<8x478xf32>
    %108 = vector.extract_strided_slice %0 {offsets = [0, 0], sizes = [8, 34], strides = [1, 1]} : vector<8x512xf32> to vector<8x34xf32>
    %109 = tpu.concatenate %107, %108 in 1 : vector<8x478xf32>, vector<8x34xf32> -> vector<8x512xf32>
    %110 = vector.extract_strided_slice %62 {offsets = [8, 0], sizes = [1, 512], strides = [1, 1]} : vector<9x512xf32> to vector<1x512xf32>
    %111 = vector.broadcast %110 : vector<1x512xf32> to vector<8x512xf32>
    %112 = arith.mulf %109, %111 : vector<8x512xf32>
    %113 = tpu.concatenate %70, %76, %82, %88, %0, %94, %100, %106, %112 in 0 : vector<8x512xf32>, vector<8x512xf32>, vector<8x512xf32>, vector<8x512xf32>, vector<8x512xf32>, vector<8x512xf32>, vector<8x512xf32>, vector<8x512xf32>, vector<8x512xf32> -> vector<72x512xf32>
    %114 = arith.truncf %113 : vector<72x512xf32> to vector<72x512xbf16>
    %cst_15 = arith.constant dense<0.000000e+00> : vector<8x512xf32>
    %115 = tpu.matmul %63, %114, %cst_15 {dimension_numbers = #tpu.dot_dimension_numbers<[1], [0], [0], [1], [0, 0, 1, 1], [], []>} : vector<8x72xbf16>, vector<72x512xbf16>, vector<8x512xf32> -> vector<8x512xf32>
    %116 = vector.broadcast %64 : vector<8x1xf32> to vector<8x512xf32>
    %117 = arith.addf %115, %116 : vector<8x512xf32>
    %cst_16 = arith.constant 0.000000e+00 : f32
    %118 = vector.broadcast %cst_16 : f32 to vector<8x512xf32>
    %119 = arith.cmpf oge, %117, %118 : vector<8x512xf32>
    %cst_17 = arith.constant 2.000000e-01 : f32
    %120 = vector.broadcast %cst_17 : f32 to vector<8x512xf32>
    %121 = arith.mulf %120, %117 : vector<8x512xf32>
    %122 = arith.select %119, %117, %121 : vector<8x512xi1>, vector<8x512xf32>
    %c0_18 = arith.constant 0 : index
    %c0_19 = arith.constant 0 : index
    %123 = vector.load %arg3[%c0_18, %c0_19] : memref<9x512xf32, #tpu.memory_space<vmem>>, vector<9x512xf32>
    %c0_20 = arith.constant 0 : index
    %c0_21 = arith.constant 0 : index
    %124 = vector.load %arg8[%c0_20, %c0_21] : memref<8x72xbf16, #tpu.memory_space<vmem>>, vector<8x72xbf16>
    %c0_22 = arith.constant 0 : index
    %c0_23 = arith.constant 0 : index
    %125 = vector.load %arg9[%c0_22, %c0_23] : memref<8x1xf32, #tpu.memory_space<vmem>>, vector<8x1xf32>
    %126 = vector.extract_strided_slice %0 {offsets = [0, 461], sizes = [8, 51], strides = [1, 1]} : vector<8x512xf32> to vector<8x51xf32>
    %127 = vector.extract_strided_slice %0 {offsets = [0, 0], sizes = [8, 461], strides = [1, 1]} : vector<8x512xf32> to vector<8x461xf32>
    %128 = tpu.concatenate %126, %127 in 1 : vector<8x51xf32>, vector<8x461xf32> -> vector<8x512xf32>
    %129 = vector.extract_strided_slice %123 {offsets = [0, 0], sizes = [1, 512], strides = [1, 1]} : vector<9x512xf32> to vector<1x512xf32>
    %130 = vector.broadcast %129 : vector<1x512xf32> to vector<8x512xf32>
    %131 = arith.mulf %128, %130 : vector<8x512xf32>
    %132 = vector.extract_strided_slice %0 {offsets = [0, 464], sizes = [8, 48], strides = [1, 1]} : vector<8x512xf32> to vector<8x48xf32>
    %133 = vector.extract_strided_slice %0 {offsets = [0, 0], sizes = [8, 464], strides = [1, 1]} : vector<8x512xf32> to vector<8x464xf32>
    %134 = tpu.concatenate %132, %133 in 1 : vector<8x48xf32>, vector<8x464xf32> -> vector<8x512xf32>
    %135 = vector.extract_strided_slice %123 {offsets = [1, 0], sizes = [1, 512], strides = [1, 1]} : vector<9x512xf32> to vector<1x512xf32>
    %136 = vector.broadcast %135 : vector<1x512xf32> to vector<8x512xf32>
    %137 = arith.mulf %134, %136 : vector<8x512xf32>
    %138 = vector.extract_strided_slice %0 {offsets = [0, 467], sizes = [8, 45], strides = [1, 1]} : vector<8x512xf32> to vector<8x45xf32>
    %139 = vector.extract_strided_slice %0 {offsets = [0, 0], sizes = [8, 467], strides = [1, 1]} : vector<8x512xf32> to vector<8x467xf32>
    %140 = tpu.concatenate %138, %139 in 1 : vector<8x45xf32>, vector<8x467xf32> -> vector<8x512xf32>
    %141 = vector.extract_strided_slice %123 {offsets = [2, 0], sizes = [1, 512], strides = [1, 1]} : vector<9x512xf32> to vector<1x512xf32>
    %142 = vector.broadcast %141 : vector<1x512xf32> to vector<8x512xf32>
    %143 = arith.mulf %140, %142 : vector<8x512xf32>
    %144 = vector.extract_strided_slice %0 {offsets = [0, 509], sizes = [8, 3], strides = [1, 1]} : vector<8x512xf32> to vector<8x3xf32>
    %145 = vector.extract_strided_slice %0 {offsets = [0, 0], sizes = [8, 509], strides = [1, 1]} : vector<8x512xf32> to vector<8x509xf32>
    %146 = tpu.concatenate %144, %145 in 1 : vector<8x3xf32>, vector<8x509xf32> -> vector<8x512xf32>
    %147 = vector.extract_strided_slice %123 {offsets = [3, 0], sizes = [1, 512], strides = [1, 1]} : vector<9x512xf32> to vector<1x512xf32>
    %148 = vector.broadcast %147 : vector<1x512xf32> to vector<8x512xf32>
    %149 = arith.mulf %146, %148 : vector<8x512xf32>
    %150 = vector.extract_strided_slice %0 {offsets = [0, 3], sizes = [8, 509], strides = [1, 1]} : vector<8x512xf32> to vector<8x509xf32>
    %151 = vector.extract_strided_slice %0 {offsets = [0, 0], sizes = [8, 3], strides = [1, 1]} : vector<8x512xf32> to vector<8x3xf32>
    %152 = tpu.concatenate %150, %151 in 1 : vector<8x509xf32>, vector<8x3xf32> -> vector<8x512xf32>
    %153 = vector.extract_strided_slice %123 {offsets = [5, 0], sizes = [1, 512], strides = [1, 1]} : vector<9x512xf32> to vector<1x512xf32>
    %154 = vector.broadcast %153 : vector<1x512xf32> to vector<8x512xf32>
    %155 = arith.mulf %152, %154 : vector<8x512xf32>
    %156 = vector.extract_strided_slice %0 {offsets = [0, 45], sizes = [8, 467], strides = [1, 1]} : vector<8x512xf32> to vector<8x467xf32>
    %157 = vector.extract_strided_slice %0 {offsets = [0, 0], sizes = [8, 45], strides = [1, 1]} : vector<8x512xf32> to vector<8x45xf32>
    %158 = tpu.concatenate %156, %157 in 1 : vector<8x467xf32>, vector<8x45xf32> -> vector<8x512xf32>
    %159 = vector.extract_strided_slice %123 {offsets = [6, 0], sizes = [1, 512], strides = [1, 1]} : vector<9x512xf32> to vector<1x512xf32>
    %160 = vector.broadcast %159 : vector<1x512xf32> to vector<8x512xf32>
    %161 = arith.mulf %158, %160 : vector<8x512xf32>
    %162 = vector.extract_strided_slice %0 {offsets = [0, 48], sizes = [8, 464], strides = [1, 1]} : vector<8x512xf32> to vector<8x464xf32>
    %163 = vector.extract_strided_slice %0 {offsets = [0, 0], sizes = [8, 48], strides = [1, 1]} : vector<8x512xf32> to vector<8x48xf32>
    %164 = tpu.concatenate %162, %163 in 1 : vector<8x464xf32>, vector<8x48xf32> -> vector<8x512xf32>
    %165 = vector.extract_strided_slice %123 {offsets = [7, 0], sizes = [1, 512], strides = [1, 1]} : vector<9x512xf32> to vector<1x512xf32>
    %166 = vector.broadcast %165 : vector<1x512xf32> to vector<8x512xf32>
    %167 = arith.mulf %164, %166 : vector<8x512xf32>
    %168 = vector.extract_strided_slice %0 {offsets = [0, 51], sizes = [8, 461], strides = [1, 1]} : vector<8x512xf32> to vector<8x461xf32>
    %169 = vector.extract_strided_slice %0 {offsets = [0, 0], sizes = [8, 51], strides = [1, 1]} : vector<8x512xf32> to vector<8x51xf32>
    %170 = tpu.concatenate %168, %169 in 1 : vector<8x461xf32>, vector<8x51xf32> -> vector<8x512xf32>
    %171 = vector.extract_strided_slice %123 {offsets = [8, 0], sizes = [1, 512], strides = [1, 1]} : vector<9x512xf32> to vector<1x512xf32>
    %172 = vector.broadcast %171 : vector<1x512xf32> to vector<8x512xf32>
    %173 = arith.mulf %170, %172 : vector<8x512xf32>
    %174 = tpu.concatenate %131, %137, %143, %149, %0, %155, %161, %167, %173 in 0 : vector<8x512xf32>, vector<8x512xf32>, vector<8x512xf32>, vector<8x512xf32>, vector<8x512xf32>, vector<8x512xf32>, vector<8x512xf32>, vector<8x512xf32>, vector<8x512xf32> -> vector<72x512xf32>
    %175 = arith.truncf %174 : vector<72x512xf32> to vector<72x512xbf16>
    %cst_24 = arith.constant dense<0.000000e+00> : vector<8x512xf32>
    %176 = tpu.matmul %124, %175, %cst_24 {dimension_numbers = #tpu.dot_dimension_numbers<[1], [0], [0], [1], [0, 0, 1, 1], [], []>} : vector<8x72xbf16>, vector<72x512xbf16>, vector<8x512xf32> -> vector<8x512xf32>
    %177 = vector.broadcast %125 : vector<8x1xf32> to vector<8x512xf32>
    %178 = arith.addf %176, %177 : vector<8x512xf32>
    %cst_25 = arith.constant 0.000000e+00 : f32
    %179 = vector.broadcast %cst_25 : f32 to vector<8x512xf32>
    %180 = arith.cmpf oge, %178, %179 : vector<8x512xf32>
    %cst_26 = arith.constant 2.000000e-01 : f32
    %181 = vector.broadcast %cst_26 : f32 to vector<8x512xf32>
    %182 = arith.mulf %181, %178 : vector<8x512xf32>
    %183 = arith.select %180, %178, %182 : vector<8x512xi1>, vector<8x512xf32>
    %c0_27 = arith.constant 0 : index
    %c0_28 = arith.constant 0 : index
    %184 = vector.load %arg10[%c0_27, %c0_28] : memref<8x24xbf16, #tpu.memory_space<vmem>>, vector<8x24xbf16>
    %185 = vector.extract_strided_slice %184 {offsets = [0, 0], sizes = [8, 8], strides = [1, 1]} : vector<8x24xbf16> to vector<8x8xbf16>
    %186 = arith.truncf %61 : vector<8x512xf32> to vector<8x512xbf16>
    %cst_29 = arith.constant dense<0.000000e+00> : vector<8x512xf32>
    %187 = tpu.matmul %185, %186, %cst_29 {dimension_numbers = #tpu.dot_dimension_numbers<[1], [0], [0], [1], [0, 0, 1, 1], [], []>} : vector<8x8xbf16>, vector<8x512xbf16>, vector<8x512xf32> -> vector<8x512xf32>
    %188 = vector.extract_strided_slice %184 {offsets = [0, 8], sizes = [8, 8], strides = [1, 1]} : vector<8x24xbf16> to vector<8x8xbf16>
    %189 = arith.truncf %122 : vector<8x512xf32> to vector<8x512xbf16>
    %cst_30 = arith.constant dense<0.000000e+00> : vector<8x512xf32>
    %190 = tpu.matmul %188, %189, %cst_30 {dimension_numbers = #tpu.dot_dimension_numbers<[1], [0], [0], [1], [0, 0, 1, 1], [], []>} : vector<8x8xbf16>, vector<8x512xbf16>, vector<8x512xf32> -> vector<8x512xf32>
    %191 = arith.addf %187, %190 : vector<8x512xf32>
    %192 = vector.extract_strided_slice %184 {offsets = [0, 16], sizes = [8, 8], strides = [1, 1]} : vector<8x24xbf16> to vector<8x8xbf16>
    %193 = arith.truncf %183 : vector<8x512xf32> to vector<8x512xbf16>
    %cst_31 = arith.constant dense<0.000000e+00> : vector<8x512xf32>
    %194 = tpu.matmul %192, %193, %cst_31 {dimension_numbers = #tpu.dot_dimension_numbers<[1], [0], [0], [1], [0, 0, 1, 1], [], []>} : vector<8x8xbf16>, vector<8x512xbf16>, vector<8x512xf32> -> vector<8x512xf32>
    %195 = arith.addf %191, %194 : vector<8x512xf32>
    %c0_32 = arith.constant 0 : index
    %c0_33 = arith.constant 0 : index
    %196 = vector.load %arg11[%c0_32, %c0_33] : memref<8x1xf32, #tpu.memory_space<vmem>>, vector<8x1xf32>
    %197 = vector.broadcast %196 : vector<8x1xf32> to vector<8x512xf32>
    %198 = arith.addf %195, %197 : vector<8x512xf32>
    %c0_34 = arith.constant 0 : index
    %c0_35 = arith.constant 0 : index
    %199 = vector.load %arg12[%c0_34, %c0_35] : memref<8x512xf32, #tpu.memory_space<vmem>>, vector<8x512xf32>
    tpu.vector_store %arg12[%c0_34, %c0_35], %198 {strides = array<i32>} : memref<8x512xf32, #tpu.memory_space<vmem>>, vector<8x512xf32>,
    return
  }
}

</mosaic_0001>

<llo_original>
// kernel: tpu_custom_call.1
$region0: #{tpu_custom_call.1}
  #allocation0 [shape = 'u32[]', space=smem, size = 0x4, offset = 0x4, fixed_abs, tag = 'smem constant byte address 0x4 - core index']
  #allocation1 [shape = 'u32[72,128]{1,0:T(1,128)}', space=vmem, size = 0x9000, scoped, tag = 'internal scratch']
  %s0 = inlined_call_operand.hbm [shape: f32[8,512], index: 0, kind: input, shape index: {}]
  %s1 = inlined_call_operand.hbm [shape: f32[9,512], index: 1, kind: input, shape index: {}]
  %s2 = inlined_call_operand.hbm [shape: f32[9,512], index: 2, kind: input, shape index: {}]
  %s3 = inlined_call_operand.hbm [shape: f32[9,512], index: 3, kind: input, shape index: {}]
  %s4 = inlined_call_operand.vmem [shape: bf16[8,72], index: 4, kind: input, shape index: {}]
  %s5 = inlined_call_operand.vmem [shape: f32[8,1], index: 5, kind: input, shape index: {}]
  %s6 = inlined_call_operand.vmem [shape: bf16[8,72], index: 6, kind: input, shape index: {}]
  %s7 = inlined_call_operand.vmem [shape: f32[8,1], index: 7, kind: input, shape index: {}]
  %s8 = inlined_call_operand.vmem [shape: bf16[8,72], index: 8, kind: input, shape index: {}]
  %s9 = inlined_call_operand.vmem [shape: f32[8,1], index: 9, kind: input, shape index: {}]
  %s10 = inlined_call_operand.vmem [shape: bf16[8,24], index: 10, kind: input, shape index: {}]
  %s11 = inlined_call_operand.vmem [shape: f32[8,1], index: 11, kind: input, shape index: {}]
  %s12 = inlined_call_operand.hbm [shape: f32[8,512], index: 12, kind: output, shape index: {}]
  %s13 = sld [smem:[#allocation0]]
  $region74: #{tpu_custom_call.1} parent=0
    _
  %s15 = ssub.s32 1, %s13
  %s16 = scalar_select 0, %s15, %s13
  $region1: #{tpu_custom_call.1} parent=0
    #allocation2 [shape = 'u8[16384]{0}', space=vmem, size = 0x4000, scoped, tag = 'input window, operand 0, single buffered']
    #allocation3 [shape = 's32[1]{0}', space=sflag, size = 0x4, scoped, tag = 'scoped memory for tpu_custom_call.1']
    #allocation4 [shape = 's32[1]{0}', space=sflag, size = 0x4, scoped, tag = 'scoped memory for tpu_custom_call.1']
    #allocation5 [shape = 'u8[32768]{0}', space=vmem, size = 0x8000, scoped, tag = 'input window, operand 1, single buffered']
    #allocation6 [shape = 's32[1]{0}', space=sflag, size = 0x4, scoped, tag = 'scoped memory for tpu_custom_call.1']
    #allocation7 [shape = 'u8[32768]{0}', space=vmem, size = 0x8000, scoped, tag = 'input window, operand 2, single buffered']
    #allocation8 [shape = 'u8[32768]{0}', space=vmem, size = 0x8000, scoped, tag = 'input window, operand 3, single buffered']
    #allocation9 [shape = 's32[1]{0}', space=sflag, size = 0x4, scoped, tag = 'scoped memory for tpu_custom_call.1']
    #allocation10 [shape = 'u8[16384]{0}', space=vmem, size = 0x4000, scoped, tag = 'output window, operand 0, single buffered']
    %17 = vsyncpa [#allocation3], 0
    %18 = vsyncpa [#allocation6], 0
    %19 = vsyncpa [#allocation9], 0
    %20 = vsyncpa [#allocation4], 0
    // Predicated region
    $region2: #{tpu_custom_call.1} parent=1 // pred_check
      _
    $region3: #{tpu_custom_call.1} parent=1 // pred_check_branch
      %22 = sbr.rel (0) target = $region5
    $region4: #{tpu_custom_call.1} parent=1 // pred_region
      %24 = vsyncadd [#allocation3], 0
      %s26 = sshll.u32 %s0, 4
      %s27 = int_to_ptr.hbm [resolvable:$true] %s26
      %s28 = sshll.u32 [#allocation2], 4
      %s29 = int_to_ptr.vmem [resolvable:$true] %s28
      %31 = dma.hbm_to_vmem [thread:$0]  %s27, 512, %s29, [#allocation3]
    $region5: #{tpu_custom_call.1} parent=1 // pred_fallthru
      _
    // Predicated region
    $region6: #{tpu_custom_call.1} parent=1 // pred_check
      _
    $region7: #{tpu_custom_call.1} parent=1 // pred_check_branch
      %33 = sbr.rel (0) target = $region9
    $region8: #{tpu_custom_call.1} parent=1 // pred_region
      %35 = vsyncadd [#allocation6], 0
      %s36 = sshll.u32 %s1, 4
      %s37 = int_to_ptr.hbm [resolvable:$true] %s36
      %s38 = sshll.u32 [#allocation5], 4
      %s39 = int_to_ptr.vmem [resolvable:$true] %s38
      %44 = dma.hbm_to_vmem [thread:$0]  %s37, 1024, %s39, [#allocation6], 512, 512, 32
    $region9: #{tpu_custom_call.1} parent=1 // pred_fallthru
      _
    // Predicated region
    $region10: #{tpu_custom_call.1} parent=1 // pred_check
      _
    $region11: #{tpu_custom_call.1} parent=1 // pred_check_branch
      %46 = sbr.rel (0) target = $region13
    $region12: #{tpu_custom_call.1} parent=1 // pred_region
      %48 = vsyncadd [#allocation6], 0
      %s49 = sshll.u32 %s2, 4
      %s50 = int_to_ptr.hbm [resolvable:$true] %s49
      %s51 = sshll.u32 [#allocation7], 4
      %s52 = int_to_ptr.vmem [resolvable:$true] %s51
      %57 = dma.hbm_to_vmem [thread:$0]  %s50, 1024, %s52, [#allocation6], 512, 512, 32
    $region13: #{tpu_custom_call.1} parent=1 // pred_fallthru
      _
    // Predicated region
    $region14: #{tpu_custom_call.1} parent=1 // pred_check
      _
    $region15: #{tpu_custom_call.1} parent=1 // pred_check_branch
      %59 = sbr.rel (0) target = $region17
    $region16: #{tpu_custom_call.1} parent=1 // pred_region
      %61 = vsyncadd [#allocation9], 0
      %s62 = sshll.u32 %s3, 4
      %s63 = int_to_ptr.hbm [resolvable:$true] %s62
      %s64 = sshll.u32 [#allocation8], 4
      %s65 = int_to_ptr.vmem [resolvable:$true] %s64
      %70 = dma.hbm_to_vmem [thread:$0]  %s63, 1024, %s65, [#allocation9], 512, 512, 32
    $region17: #{tpu_custom_call.1} parent=1 // pred_fallthru
      _
    // Predicated region
    $region18: #{tpu_custom_call.1} parent=1 // pred_check
      _
    $region19: #{tpu_custom_call.1} parent=1 // pred_check_branch
      %72 = sbr.rel (0) target = $region21
    $region20: #{tpu_custom_call.1} parent=1 // pred_region
      _
    $region21: #{tpu_custom_call.1} parent=1 // pred_fallthru
      _
    // Predicated region
    $region22: #{tpu_custom_call.1} parent=1 // pred_check
      _
    $region23: #{tpu_custom_call.1} parent=1 // pred_check_branch
      %74 = sbr.rel (0) target = $region25
    $region24: #{tpu_custom_call.1} parent=1 // pred_region
      _
    $region25: #{tpu_custom_call.1} parent=1 // pred_fallthru
      _
    // Predicated region
    $region26: #{tpu_custom_call.1} parent=1 // pred_check
      _
    $region27: #{tpu_custom_call.1} parent=1 // pred_check_branch
      %76 = sbr.rel (0) target = $region29
    $region28: #{tpu_custom_call.1} parent=1 // pred_region
      _
    $region29: #{tpu_custom_call.1} parent=1 // pred_fallthru
      _
    // Predicated region
    $region30: #{tpu_custom_call.1} parent=1 // pred_check
      _
    $region31: #{tpu_custom_call.1} parent=1 // pred_check_branch
      %78 = sbr.rel (0) target = $region33
    $region32: #{tpu_custom_call.1} parent=1 // pred_region
      _
    $region33: #{tpu_custom_call.1} parent=1 // pred_fallthru
      _
    // Predicated region
    $region34: #{tpu_custom_call.1} parent=1 // pred_check
      _
    $region35: #{tpu_custom_call.1} parent=1 // pred_check_branch
      %80 = sbr.rel (0) target = $region37
    $region36: #{tpu_custom_call.1} parent=1 // pred_region
      _
    $region37: #{tpu_custom_call.1} parent=1 // pred_fallthru
      _
    // Predicated region
    $region38: #{tpu_custom_call.1} parent=1 // pred_check
      _
    $region39: #{tpu_custom_call.1} parent=1 // pred_check_branch
      %82 = sbr.rel (0) target = $region41
    $region40: #{tpu_custom_call.1} parent=1 // pred_region
      _
    $region41: #{tpu_custom_call.1} parent=1 // pred_fallthru
      _
    // Predicated region
    $region42: #{tpu_custom_call.1} parent=1 // pred_check
      _
    $region43: #{tpu_custom_call.1} parent=1 // pred_check_branch
      %84 = sbr.rel (0) target = $region45
    $region44: #{tpu_custom_call.1} parent=1 // pred_region
      _
    $region45: #{tpu_custom_call.1} parent=1 // pred_fallthru
      _
    // Predicated region
    $region46: #{tpu_custom_call.1} parent=1 // pred_check
      _
    $region47: #{tpu_custom_call.1} parent=1 // pred_check_branch
      %86 = sbr.rel (0) target = $region49
    $region48: #{tpu_custom_call.1} parent=1 // pred_region
      _
    $region49: #{tpu_custom_call.1} parent=1 // pred_fallthru
      _
    // Predicated region
    $region50: #{tpu_custom_call.1} parent=1 // pred_check
      _
    $region51: #{tpu_custom_call.1} parent=1 // pred_check_branch
      %88 = sbr.rel (0) target = $region53
    $region52: #{tpu_custom_call.1} parent=1 // pred_region
      %90 = dma.done [#allocation3], 512
    $region53: #{tpu_custom_call.1} parent=1 // pred_fallthru
      _
    // Predicated region
    $region54: #{tpu_custom_call.1} parent=1 // pred_check
      _
    $region55: #{tpu_custom_call.1} parent=1 // pred_check_branch
      %92 = sbr.rel (0) target = $region57
    $region56: #{tpu_custom_call.1} parent=1 // pred_region
      %94 = dma.done [#allocation6], 1024
    $region57: #{tpu_custom_call.1} parent=1 // pred_fallthru
      _
    // Predicated region
    $region58: #{tpu_custom_call.1} parent=1 // pred_check
      _
    $region59: #{tpu_custom_call.1} parent=1 // pred_check_branch
      %96 = sbr.rel (0) target = $region61
    $region60: #{tpu_custom_call.1} parent=1 // pred_region
      %98 = dma.done [#allocation6], 1024
    $region61: #{tpu_custom_call.1} parent=1 // pred_fallthru
      _
    // Predicated region
    $region62: #{tpu_custom_call.1} parent=1 // pred_check
      _
    $region63: #{tpu_custom_call.1} parent=1 // pred_check_branch
      %100 = sbr.rel (0) target = $region65
    $region64: #{tpu_custom_call.1} parent=1 // pred_region
      %102 = dma.done [#allocation9], 1024
    $region65: #{tpu_custom_call.1} parent=1 // pred_fallthru
      _
    %v104 = vld [vmem:[#allocation2] sm:$0xff]
    %v105 = vld [vmem:[#allocation2 + $0x8] sm:$0xff]
    %v106 = vld [vmem:[#allocation2 + $0x10] sm:$0xff]
    %v107 = vld [vmem:[#allocation2 + $0x18] sm:$0xff]
    %v108 = vld [vmem:[#allocation5] sm:$0xff]
    %v109 = vld [vmem:[#allocation5 + $0x8] sm:$0xff]
    %v110 = vld [vmem:[#allocation5 + $0x10] sm:$0xff]
    %v111 = vld [vmem:[#allocation5 + $0x18] sm:$0xff]
    %v112 = vld [vmem:[#allocation5 + $0x20] sm:$0x1]
    %v113 = vld [vmem:[#allocation5 + $0x28] sm:$0x1]
    %v114 = vld [vmem:[#allocation5 + $0x30] sm:$0x1]
    %v115 = vld [vmem:[#allocation5 + $0x38] sm:$0x1]
    %v116 = vld [vmem:[%s4] sm:$0xf]
    %v117 = vld [vmem:[%s5] sm:$0xff]
    %119 = vrot.lane.b32.xlu0 %v107, 17
    %v120 = vpop.permute.xlu0 %119
    %125 = vrot.lane.b32.xlu0 %v104, 17
    %v126 = vpop.permute.xlu0 %125
    %127 = vrot.lane.b32.xlu0 %v105, 17
    %v128 = vpop.permute.xlu0 %127
    %129 = vrot.lane.b32.xlu0 %v106, 17
    %v130 = vpop.permute.xlu0 %129
    %vm131 = vcmask 138240
    %v132 = vsel %vm131, %v126, %v128
    %v133 = vsel %vm131, %v128, %v130
    %v134 = vsel %vm131, %v130, %v120
    %v139 = vsel %vm131, %v120, %v126
    %v140 = vperm.slane %v108, 0
    %v141 = vperm.slane %v109, 0
    %v142 = vperm.slane %v110, 0
    %v143 = vperm.slane %v111, 0
    %v144 = vmul.f32 %v139, %v140
    %v145 = vmul.f32 %v132, %v141
    %v146 = vmul.f32 %v133, %v142
    %v147 = vmul.f32 %v134, %v143
    %148 = vrot.lane.b32.xlu0 %v107, 16
    %v149 = vpop.permute.xlu0 %148
    %151 = vrot.lane.b32.xlu0 %v104, 16
    %v152 = vpop.permute.xlu0 %151
    %153 = vrot.lane.b32.xlu0 %v105, 16
    %v154 = vpop.permute.xlu0 %153
    %155 = vrot.lane.b32.xlu0 %v106, 16
    %v156 = vpop.permute.xlu0 %155
    %vm157 = vcmask 130048
    %v158 = vsel %vm157, %v152, %v154
    %v159 = vsel %vm157, %v154, %v156
    %v160 = vsel %vm157, %v156, %v149
    %v165 = vsel %vm157, %v149, %v152
    %v166 = vperm.slane %v108, 1
    %v167 = vperm.slane %v109, 1
    %v168 = vperm.slane %v110, 1
    %v169 = vperm.slane %v111, 1
    %v170 = vmul.f32 %v165, %v166
    %v171 = vmul.f32 %v158, %v167
    %v172 = vmul.f32 %v159, %v168
    %v173 = vmul.f32 %v160, %v169
    %174 = vrot.lane.b32.xlu0 %v107, 15
    %v175 = vpop.permute.xlu0 %174
    %177 = vrot.lane.b32.xlu0 %v104, 15
    %v178 = vpop.permute.xlu0 %177
    %179 = vrot.lane.b32.xlu0 %v105, 15
    %v180 = vpop.permute.xlu0 %179
    %181 = vrot.lane.b32.xlu0 %v106, 15
    %v182 = vpop.permute.xlu0 %181
    %vm183 = vcmask 121856
    %v184 = vsel %vm183, %v178, %v180
    %v185 = vsel %vm183, %v180, %v182
    %v186 = vsel %vm183, %v182, %v175
    %v191 = vsel %vm183, %v175, %v178
    %v192 = vperm.slane %v108, 2
    %v193 = vperm.slane %v109, 2
    %v194 = vperm.slane %v110, 2
    %v195 = vperm.slane %v111, 2
    %v196 = vmul.f32 %v191, %v192
    %v197 = vmul.f32 %v184, %v193
    %v198 = vmul.f32 %v185, %v194
    %v199 = vmul.f32 %v186, %v195
    %200 = vrot.lane.b32.xlu0 %v107, 1
    %v201 = vpop.permute.xlu0 %200
    %203 = vrot.lane.b32.xlu0 %v104, 1
    %v204 = vpop.permute.xlu0 %203
    %205 = vrot.lane.b32.xlu0 %v105, 1
    %v206 = vpop.permute.xlu0 %205
    %207 = vrot.lane.b32.xlu0 %v106, 1
    %v208 = vpop.permute.xlu0 %207
    %vm209 = vcmask 7168
    %v210 = vsel %vm209, %v204, %v206
    %v211 = vsel %vm209, %v206, %v208
    %v212 = vsel %vm209, %v208, %v201
    %v217 = vsel %vm209, %v201, %v204
    %v218 = vperm.slane %v108, 3
    %v219 = vperm.slane %v109, 3
    %v220 = vperm.slane %v110, 3
    %v221 = vperm.slane %v111, 3
    %v222 = vmul.f32 %v217, %v218
    %v223 = vmul.f32 %v210, %v219
    %v224 = vmul.f32 %v211, %v220
    %v225 = vmul.f32 %v212, %v221
    %226 = vrot.lane.b32.xlu0 %v104, 127
    %v227 = vpop.permute.xlu0 %226
    %228 = vrot.lane.b32.xlu0 %v105, 127
    %v229 = vpop.permute.xlu0 %228
    %230 = vrot.lane.b32.xlu0 %v106, 127
    %v231 = vpop.permute.xlu0 %230
    %232 = vrot.lane.b32.xlu0 %v107, 127
    %v233 = vpop.permute.xlu0 %232
    %vm234 = vcmask 1039360
    %v235 = vsel %vm234, %v227, %v229
    %v236 = vsel %vm234, %v229, %v231
    %v237 = vsel %vm234, %v231, %v233
    %v243 = vsel %vm234, %v233, %v227
    %v244 = vperm.slane %v108, 5
    %v245 = vperm.slane %v109, 5
    %v246 = vperm.slane %v110, 5
    %v247 = vperm.slane %v111, 5
    %v248 = vmul.f32 %v235, %v244
    %v249 = vmul.f32 %v236, %v245
    %v250 = vmul.f32 %v237, %v246
    %v251 = vmul.f32 %v243, %v247
    %252 = vrot.lane.b32.xlu0 %v104, 113
    %v253 = vpop.permute.xlu0 %252
    %254 = vrot.lane.b32.xlu0 %v105, 113
    %v255 = vpop.permute.xlu0 %254
    %256 = vrot.lane.b32.xlu0 %v106, 113
    %v257 = vpop.permute.xlu0 %256
    %258 = vrot.lane.b32.xlu0 %v107, 113
    %v259 = vpop.permute.xlu0 %258
    %vm260 = vcmask 924672
    %v261 = vsel %vm260, %v253, %v255
    %v262 = vsel %vm260, %v255, %v257
    %v263 = vsel %vm260, %v257, %v259
    %v269 = vsel %vm260, %v259, %v253
    %v270 = vperm.slane %v108, 6
    %v271 = vperm.slane %v109, 6
    %v272 = vperm.slane %v110, 6
    %v273 = vperm.slane %v111, 6
    %v274 = vmul.f32 %v261, %v270
    %v275 = vmul.f32 %v262, %v271
    %v276 = vmul.f32 %v263, %v272
    %v277 = vmul.f32 %v269, %v273
    %278 = vrot.lane.b32.xlu0 %v104, 112
    %v279 = vpop.permute.xlu0 %278
    %280 = vrot.lane.b32.xlu0 %v105, 112
    %v281 = vpop.permute.xlu0 %280
    %282 = vrot.lane.b32.xlu0 %v106, 112
    %v283 = vpop.permute.xlu0 %282
    %284 = vrot.lane.b32.xlu0 %v107, 112
    %v285 = vpop.permute.xlu0 %284
    %vm286 = vcmask 916480
    %v287 = vsel %vm286, %v279, %v281
    %v288 = vsel %vm286, %v281, %v283
    %v289 = vsel %vm286, %v283, %v285
    %v295 = vsel %vm286, %v285, %v279
    %v296 = vperm.slane %v108, 7
    %v297 = vperm.slane %v109, 7
    %v298 = vperm.slane %v110, 7
    %v299 = vperm.slane %v111, 7
    %v300 = vmul.f32 %v287, %v296
    %v301 = vmul.f32 %v288, %v297
    %v302 = vmul.f32 %v289, %v298
    %v303 = vmul.f32 %v295, %v299
    %304 = vrot.lane.b32.xlu0 %v104, 111
    %v305 = vpop.permute.xlu0 %304
    %306 = vrot.lane.b32.xlu0 %v105, 111
    %v307 = vpop.permute.xlu0 %306
    %308 = vrot.lane.b32.xlu0 %v106, 111
    %v309 = vpop.permute.xlu0 %308
    %310 = vrot.lane.b32.xlu0 %v107, 111
    %v311 = vpop.permute.xlu0 %310
    %vm312 = vcmask 908288
    %v313 = vsel %vm312, %v305, %v307
    %v314 = vsel %vm312, %v307, %v309
    %v315 = vsel %vm312, %v309, %v311
    %v321 = vsel %vm312, %v311, %v305
    %v322 = vperm.slane %v112, 0
    %v323 = vperm.slane %v113, 0
    %v324 = vperm.slane %v114, 0
    %v325 = vperm.slane %v115, 0
    %v326 = vmul.f32 %v313, %v322
    %v327 = vmul.f32 %v314, %v323
    %v328 = vmul.f32 %v315, %v324
    %v329 = vmul.f32 %v321, %v325
    %v330 = vpack.c.bf16 %v170, %v144
    %v331 = vpack.c.bf16 %v171, %v145
    %v332 = vpack.c.bf16 %v172, %v146
    %v333 = vpack.c.bf16 %v173, %v147
    %v334 = vpack.c.bf16 %v222, %v196
    %v335 = vpack.c.bf16 %v223, %v197
    %v336 = vpack.c.bf16 %v224, %v198
    %v337 = vpack.c.bf16 %v225, %v199
    %v338 = vpack.c.bf16 %v248, %v104
    %v339 = vpack.c.bf16 %v249, %v105
    %v340 = vpack.c.bf16 %v250, %v106
    %v341 = vpack.c.bf16 %v251, %v107
    %v342 = vpack.c.bf16 %v300, %v274
    %v343 = vpack.c.bf16 %v301, %v275
    %v344 = vpack.c.bf16 %v302, %v276
    %v345 = vpack.c.bf16 %v303, %v277
    %v346 = vpack.c.bf16 %v326, %v326
    %v347 = vpack.c.bf16 %v327, %v327
    %v348 = vpack.c.bf16 %v328, %v328
    %v349 = vpack.c.bf16 %v329, %v329
    %351 = vset.pattern.permute.xlu0 0
    %352 = vperm.xlu0 %351, %v117
    %v353 = vpop.permute.xlu0 %352
    %vm355 = vcmask 588800
    %v357 = vsel %vm355, %v116, 0
    %vm359 = vcmask 1043456
    %v361 = vsel %vm359, %v346, 0
    %v364 = vsel %vm359, %v347, 0
    %v367 = vsel %vm359, %v348, 0
    %v370 = vsel %vm359, %v349, 0
    %372 = vmatpush.bf16.msra.mxu0 0
    %373 = vmatpush.bf16.msra.mxu0 0
    %374 = vmatpush.bf16.msra.mxu0 0
    %375 = vmatpush.bf16.msra.mxu0 %v361
    %376 = vmatpush.bf16.msra.mxu0 %v342
    %377 = vmatpush.bf16.msra.mxu0 %v338
    %378 = vmatpush.bf16.msra.mxu0 %v334
    %379 = vmatpush.bf16.msra.mxu0 %v330
    %380 = vmatmul.bf16.gmra.mxu0 %v357
    %v381 = vpop.f32.mrf.mxu0
    %v382 = vadd.f32 %v353, %v381
    %v383 = vpop.f32.mrf.mxu0
    %384 = vdwg.mxu0
    %385 = vmatpush.bf16.msra.mxu0 0
    %386 = vmatpush.bf16.msra.mxu0 0
    %387 = vmatpush.bf16.msra.mxu0 0
    %388 = vmatpush.bf16.msra.mxu0 %v364
    %389 = vmatpush.bf16.msra.mxu0 %v343
    %390 = vmatpush.bf16.msra.mxu0 %v339
    %391 = vmatpush.bf16.msra.mxu0 %v335
    %392 = vmatpush.bf16.msra.mxu0 %v331
    %393 = vmatmul.bf16.gmra.mxu0 %v357
    %v394 = vpop.f32.mrf.mxu0
    %v395 = vadd.f32 %v353, %v394
    %v396 = vpop.f32.mrf.mxu0
    %397 = vdwg.mxu0
    %398 = vmatpush.bf16.msra.mxu0 0
    %399 = vmatpush.bf16.msra.mxu0 0
    %400 = vmatpush.bf16.msra.mxu0 0
    %401 = vmatpush.bf16.msra.mxu0 %v367
    %402 = vmatpush.bf16.msra.mxu0 %v344
    %403 = vmatpush.bf16.msra.mxu0 %v340
    %404 = vmatpush.bf16.msra.mxu0 %v336
    %405 = vmatpush.bf16.msra.mxu0 %v332
    %406 = vmatmul.bf16.gmra.mxu0 %v357
    %v407 = vpop.f32.mrf.mxu0
    %v408 = vadd.f32 %v353, %v407
    %v409 = vpop.f32.mrf.mxu0
    %410 = vdwg.mxu0
    %411 = vmatpush.bf16.msra.mxu0 0
    %412 = vmatpush.bf16.msra.mxu0 0
    %413 = vmatpush.bf16.msra.mxu0 0
    %414 = vmatpush.bf16.msra.mxu0 %v370
    %415 = vmatpush.bf16.msra.mxu0 %v345
    %416 = vmatpush.bf16.msra.mxu0 %v341
    %417 = vmatpush.bf16.msra.mxu0 %v337
    %418 = vmatpush.bf16.msra.mxu0 %v333
    %419 = vmatmul.bf16.gmra.mxu0 %v357
    %v420 = vpop.f32.mrf.mxu0
    %v421 = vadd.f32 %v353, %v420
    %v422 = vpop.f32.mrf.mxu0
    %423 = vdwg.mxu0
    %vm424 = vcmp.ge.f32.partialorder %v382, 0.0
    %vm425 = vcmp.ge.f32.partialorder %v395, 0.0
    %vm426 = vcmp.ge.f32.partialorder %v408, 0.0
    %vm427 = vcmp.ge.f32.partialorder %v421, 0.0
    %v428 = vmul.f32 %v382, 0.2
    %v429 = vmul.f32 %v395, 0.2
    %v430 = vmul.f32 %v408, 0.2
    %v431 = vmul.f32 %v421, 0.2
    %v432 = vsel %vm424, %v382, %v428
    %v433 = vsel %vm425, %v395, %v429
    %v434 = vsel %vm426, %v408, %v430
    %v435 = vsel %vm427, %v421, %v431
    %v436 = vld [vmem:[#allocation7] sm:$0xff]
    %v437 = vld [vmem:[#allocation7 + $0x8] sm:$0xff]
    %v438 = vld [vmem:[#allocation7 + $0x10] sm:$0xff]
    %v439 = vld [vmem:[#allocation7 + $0x18] sm:$0xff]
    %v440 = vld [vmem:[#allocation7 + $0x20] sm:$0x1]
    %v441 = vld [vmem:[#allocation7 + $0x28] sm:$0x1]
    %v442 = vld [vmem:[#allocation7 + $0x30] sm:$0x1]
    %v443 = vld [vmem:[#allocation7 + $0x38] sm:$0x1]
    %v444 = vld [vmem:[%s6] sm:$0xf]
    %v445 = vld [vmem:[%s7] sm:$0xff]
    %446 = vrot.lane.b32.xlu0 %v107, 34
    %v447 = vpop.permute.xlu0 %446
    %449 = vrot.lane.b32.xlu0 %v104, 34
    %v450 = vpop.permute.xlu0 %449
    %451 = vrot.lane.b32.xlu0 %v105, 34
    %v452 = vpop.permute.xlu0 %451
    %453 = vrot.lane.b32.xlu0 %v106, 34
    %v454 = vpop.permute.xlu0 %453
    %vm455 = vcmask 277504
    %v456 = vsel %vm455, %v450, %v452
    %v457 = vsel %vm455, %v452, %v454
    %v458 = vsel %vm455, %v454, %v447
    %v463 = vsel %vm455, %v447, %v450
    %v464 = vperm.slane %v436, 0
    %v465 = vperm.slane %v437, 0
    %v466 = vperm.slane %v438, 0
    %v467 = vperm.slane %v439, 0
    %v468 = vmul.f32 %v463, %v464
    %v469 = vmul.f32 %v456, %v465
    %v470 = vmul.f32 %v457, %v466
    %v471 = vmul.f32 %v458, %v467
    %472 = vrot.lane.b32.xlu0 %v107, 32
    %v473 = vpop.permute.xlu0 %472
    %475 = vrot.lane.b32.xlu0 %v104, 32
    %v476 = vpop.permute.xlu0 %475
    %477 = vrot.lane.b32.xlu0 %v105, 32
    %v478 = vpop.permute.xlu0 %477
    %479 = vrot.lane.b32.xlu0 %v106, 32
    %v480 = vpop.permute.xlu0 %479
    %vm481 = vcmask 261120
    %v482 = vsel %vm481, %v476, %v478
    %v483 = vsel %vm481, %v478, %v480
    %v484 = vsel %vm481, %v480, %v473
    %v489 = vsel %vm481, %v473, %v476
    %v490 = vperm.slane %v436, 1
    %v491 = vperm.slane %v437, 1
    %v492 = vperm.slane %v438, 1
    %v493 = vperm.slane %v439, 1
    %v494 = vmul.f32 %v489, %v490
    %v495 = vmul.f32 %v482, %v491
    %v496 = vmul.f32 %v483, %v492
    %v497 = vmul.f32 %v484, %v493
    %498 = vrot.lane.b32.xlu0 %v107, 30
    %v499 = vpop.permute.xlu0 %498
    %501 = vrot.lane.b32.xlu0 %v104, 30
    %v502 = vpop.permute.xlu0 %501
    %503 = vrot.lane.b32.xlu0 %v105, 30
    %v504 = vpop.permute.xlu0 %503
    %505 = vrot.lane.b32.xlu0 %v106, 30
    %v506 = vpop.permute.xlu0 %505
    %vm507 = vcmask 244736
    %v508 = vsel %vm507, %v502, %v504
    %v509 = vsel %vm507, %v504, %v506
    %v510 = vsel %vm507, %v506, %v499
    %v515 = vsel %vm507, %v499, %v502
    %v516 = vperm.slane %v436, 2
    %v517 = vperm.slane %v437, 2
    %v518 = vperm.slane %v438, 2
    %v519 = vperm.slane %v439, 2
    %v520 = vmul.f32 %v515, %v516
    %v521 = vmul.f32 %v508, %v517
    %v522 = vmul.f32 %v509, %v518
    %v523 = vmul.f32 %v510, %v519
    %524 = vrot.lane.b32.xlu0 %v107, 2
    %v525 = vpop.permute.xlu0 %524
    %527 = vrot.lane.b32.xlu0 %v104, 2
    %v528 = vpop.permute.xlu0 %527
    %529 = vrot.lane.b32.xlu0 %v105, 2
    %v530 = vpop.permute.xlu0 %529
    %531 = vrot.lane.b32.xlu0 %v106, 2
    %v532 = vpop.permute.xlu0 %531
    %vm533 = vcmask 15360
    %v534 = vsel %vm533, %v528, %v530
    %v535 = vsel %vm533, %v530, %v532
    %v536 = vsel %vm533, %v532, %v525
    %v541 = vsel %vm533, %v525, %v528
    %v542 = vperm.slane %v436, 3
    %v543 = vperm.slane %v437, 3
    %v544 = vperm.slane %v438, 3
    %v545 = vperm.slane %v439, 3
    %v546 = vmul.f32 %v541, %v542
    %v547 = vmul.f32 %v534, %v543
    %v548 = vmul.f32 %v535, %v544
    %v549 = vmul.f32 %v536, %v545
    %550 = vrot.lane.b32.xlu0 %v104, 126
    %v551 = vpop.permute.xlu0 %550
    %552 = vrot.lane.b32.xlu0 %v105, 126
    %v553 = vpop.permute.xlu0 %552
    %554 = vrot.lane.b32.xlu0 %v106, 126
    %v555 = vpop.permute.xlu0 %554
    %556 = vrot.lane.b32.xlu0 %v107, 126
    %v557 = vpop.permute.xlu0 %556
    %vm558 = vcmask 1031168
    %v559 = vsel %vm558, %v551, %v553
    %v560 = vsel %vm558, %v553, %v555
    %v561 = vsel %vm558, %v555, %v557
    %v567 = vsel %vm558, %v557, %v551
    %v568 = vperm.slane %v436, 5
    %v569 = vperm.slane %v437, 5
    %v570 = vperm.slane %v438, 5
    %v571 = vperm.slane %v439, 5
    %v572 = vmul.f32 %v559, %v568
    %v573 = vmul.f32 %v560, %v569
    %v574 = vmul.f32 %v561, %v570
    %v575 = vmul.f32 %v567, %v571
    %576 = vrot.lane.b32.xlu0 %v104, 98
    %v577 = vpop.permute.xlu0 %576
    %578 = vrot.lane.b32.xlu0 %v105, 98
    %v579 = vpop.permute.xlu0 %578
    %580 = vrot.lane.b32.xlu0 %v106, 98
    %v581 = vpop.permute.xlu0 %580
    %582 = vrot.lane.b32.xlu0 %v107, 98
    %v583 = vpop.permute.xlu0 %582
    %vm584 = vcmask 801792
    %v585 = vsel %vm584, %v577, %v579
    %v586 = vsel %vm584, %v579, %v581
    %v587 = vsel %vm584, %v581, %v583
    %v593 = vsel %vm584, %v583, %v577
    %v594 = vperm.slane %v436, 6
    %v595 = vperm.slane %v437, 6
    %v596 = vperm.slane %v438, 6
    %v597 = vperm.slane %v439, 6
    %v598 = vmul.f32 %v585, %v594
    %v599 = vmul.f32 %v586, %v595
    %v600 = vmul.f32 %v587, %v596
    %v601 = vmul.f32 %v593, %v597
    %602 = vrot.lane.b32.xlu0 %v104, 96
    %v603 = vpop.permute.xlu0 %602
    %604 = vrot.lane.b32.xlu0 %v105, 96
    %v605 = vpop.permute.xlu0 %604
    %606 = vrot.lane.b32.xlu0 %v106, 96
    %v607 = vpop.permute.xlu0 %606
    %608 = vrot.lane.b32.xlu0 %v107, 96
    %v609 = vpop.permute.xlu0 %608
    %vm610 = vcmask 785408
    %v611 = vsel %vm610, %v603, %v605
    %v612 = vsel %vm610, %v605, %v607
    %v613 = vsel %vm610, %v607, %v609
    %v619 = vsel %vm610, %v609, %v603
    %v620 = vperm.slane %v436, 7
    %v621 = vperm.slane %v437, 7
    %v622 = vperm.slane %v438, 7
    %v623 = vperm.slane %v439, 7
    %v624 = vmul.f32 %v611, %v620
    %v625 = vmul.f32 %v612, %v621
    %v626 = vmul.f32 %v613, %v622
    %v627 = vmul.f32 %v619, %v623
    %628 = vrot.lane.b32.xlu0 %v104, 94
    %v629 = vpop.permute.xlu0 %628
    %630 = vrot.lane.b32.xlu0 %v105, 94
    %v631 = vpop.permute.xlu0 %630
    %632 = vrot.lane.b32.xlu0 %v106, 94
    %v633 = vpop.permute.xlu0 %632
    %634 = vrot.lane.b32.xlu0 %v107, 94
    %v635 = vpop.permute.xlu0 %634
    %vm636 = vcmask 769024
    %v637 = vsel %vm636, %v629, %v631
    %v638 = vsel %vm636, %v631, %v633
    %v639 = vsel %vm636, %v633, %v635
    %v645 = vsel %vm636, %v635, %v629
    %v646 = vperm.slane %v440, 0
    %v647 = vperm.slane %v441, 0
    %v648 = vperm.slane %v442, 0
    %v649 = vperm.slane %v443, 0
    %v650 = vmul.f32 %v637, %v646
    %v651 = vmul.f32 %v638, %v647
    %v652 = vmul.f32 %v639, %v648
    %v653 = vmul.f32 %v645, %v649
    %v654 = vpack.c.bf16 %v494, %v468
    %v655 = vpack.c.bf16 %v495, %v469
    %v656 = vpack.c.bf16 %v496, %v470
    %v657 = vpack.c.bf16 %v497, %v471
    %v658 = vpack.c.bf16 %v546, %v520
    %v659 = vpack.c.bf16 %v547, %v521
    %v660 = vpack.c.bf16 %v548, %v522
    %v661 = vpack.c.bf16 %v549, %v523
    %v662 = vpack.c.bf16 %v572, %v104
    %v663 = vpack.c.bf16 %v573, %v105
    %v664 = vpack.c.bf16 %v574, %v106
    %v665 = vpack.c.bf16 %v575, %v107
    %v666 = vpack.c.bf16 %v624, %v598
    %v667 = vpack.c.bf16 %v625, %v599
    %v668 = vpack.c.bf16 %v626, %v600
    %v669 = vpack.c.bf16 %v627, %v601
    %v670 = vpack.c.bf16 %v650, %v650
    %v671 = vpack.c.bf16 %v651, %v651
    %v672 = vpack.c.bf16 %v652, %v652
    %v673 = vpack.c.bf16 %v653, %v653
    %675 = vset.pattern.permute.xlu0 0
    %676 = vperm.xlu0 %675, %v445
    %v677 = vpop.permute.xlu0 %676
    %v680 = vsel %vm355, %v444, 0
    %v683 = vsel %vm359, %v670, 0
    %v686 = vsel %vm359, %v671, 0
    %v689 = vsel %vm359, %v672, 0
    %v692 = vsel %vm359, %v673, 0
    %694 = vmatpush.bf16.msra.mxu0 0
    %695 = vmatpush.bf16.msra.mxu0 0
    %696 = vmatpush.bf16.msra.mxu0 0
    %697 = vmatpush.bf16.msra.mxu0 %v683
    %698 = vmatpush.bf16.msra.mxu0 %v666
    %699 = vmatpush.bf16.msra.mxu0 %v662
    %700 = vmatpush.bf16.msra.mxu0 %v658
    %701 = vmatpush.bf16.msra.mxu0 %v654
    %702 = vmatmul.bf16.gmra.mxu0 %v680
    %v703 = vpop.f32.mrf.mxu0
    %v704 = vadd.f32 %v677, %v703
    %v705 = vpop.f32.mrf.mxu0
    %706 = vdwg.mxu0
    %707 = vmatpush.bf16.msra.mxu0 0
    %708 = vmatpush.bf16.msra.mxu0 0
    %709 = vmatpush.bf16.msra.mxu0 0
    %710 = vmatpush.bf16.msra.mxu0 %v686
    %711 = vmatpush.bf16.msra.mxu0 %v667
    %712 = vmatpush.bf16.msra.mxu0 %v663
    %713 = vmatpush.bf16.msra.mxu0 %v659
    %714 = vmatpush.bf16.msra.mxu0 %v655
    %715 = vmatmul.bf16.gmra.mxu0 %v680
    %v716 = vpop.f32.mrf.mxu0
    %v717 = vadd.f32 %v677, %v716
    %v718 = vpop.f32.mrf.mxu0
    %719 = vdwg.mxu0
    %720 = vmatpush.bf16.msra.mxu0 0
    %721 = vmatpush.bf16.msra.mxu0 0
    %722 = vmatpush.bf16.msra.mxu0 0
    %723 = vmatpush.bf16.msra.mxu0 %v689
    %724 = vmatpush.bf16.msra.mxu0 %v668
    %725 = vmatpush.bf16.msra.mxu0 %v664
    %726 = vmatpush.bf16.msra.mxu0 %v660
    %727 = vmatpush.bf16.msra.mxu0 %v656
    %728 = vmatmul.bf16.gmra.mxu0 %v680
    %v729 = vpop.f32.mrf.mxu0
    %v730 = vadd.f32 %v677, %v729
    %v731 = vpop.f32.mrf.mxu0
    %732 = vdwg.mxu0
    %733 = vmatpush.bf16.msra.mxu0 0
    %734 = vmatpush.bf16.msra.mxu0 0
    %735 = vmatpush.bf16.msra.mxu0 0
    %736 = vmatpush.bf16.msra.mxu0 %v692
    %737 = vmatpush.bf16.msra.mxu0 %v669
    %738 = vmatpush.bf16.msra.mxu0 %v665
    %739 = vmatpush.bf16.msra.mxu0 %v661
    %740 = vmatpush.bf16.msra.mxu0 %v657
    %741 = vmatmul.bf16.gmra.mxu0 %v680
    %v742 = vpop.f32.mrf.mxu0
    %v743 = vadd.f32 %v677, %v742
    %v744 = vpop.f32.mrf.mxu0
    %745 = vdwg.mxu0
    %vm746 = vcmp.ge.f32.partialorder %v704, 0.0
    %vm747 = vcmp.ge.f32.partialorder %v717, 0.0
    %vm748 = vcmp.ge.f32.partialorder %v730, 0.0
    %vm749 = vcmp.ge.f32.partialorder %v743, 0.0
    %v750 = vmul.f32 %v704, 0.2
    %v751 = vmul.f32 %v717, 0.2
    %v752 = vmul.f32 %v730, 0.2
    %v753 = vmul.f32 %v743, 0.2
    %v754 = vsel %vm746, %v704, %v750
    %v755 = vsel %vm747, %v717, %v751
    %v756 = vsel %vm748, %v730, %v752
    %v757 = vsel %vm749, %v743, %v753
    %v758 = vld [vmem:[#allocation8] sm:$0xff]
    %v759 = vld [vmem:[#allocation8 + $0x8] sm:$0xff]
    %v760 = vld [vmem:[#allocation8 + $0x10] sm:$0xff]
    %v761 = vld [vmem:[#allocation8 + $0x18] sm:$0xff]
    %v762 = vld [vmem:[#allocation8 + $0x20] sm:$0x1]
    %v763 = vld [vmem:[#allocation8 + $0x28] sm:$0x1]
    %v764 = vld [vmem:[#allocation8 + $0x30] sm:$0x1]
    %v765 = vld [vmem:[#allocation8 + $0x38] sm:$0x1]
    %v766 = vld [vmem:[%s8] sm:$0xf]
    %v767 = vld [vmem:[%s9] sm:$0xff]
    %768 = vrot.lane.b32.xlu0 %v107, 51
    %v769 = vpop.permute.xlu0 %768
    %771 = vrot.lane.b32.xlu0 %v104, 51
    %v772 = vpop.permute.xlu0 %771
    %773 = vrot.lane.b32.xlu0 %v105, 51
    %v774 = vpop.permute.xlu0 %773
    %775 = vrot.lane.b32.xlu0 %v106, 51
    %v776 = vpop.permute.xlu0 %775
    %vm777 = vcmask 416768
    %v778 = vsel %vm777, %v772, %v774
    %v779 = vsel %vm777, %v774, %v776
    %v780 = vsel %vm777, %v776, %v769
    %v785 = vsel %vm777, %v769, %v772
    %v786 = vperm.slane %v758, 0
    %v787 = vperm.slane %v759, 0
    %v788 = vperm.slane %v760, 0
    %v789 = vperm.slane %v761, 0
    %v790 = vmul.f32 %v785, %v786
    %v791 = vmul.f32 %v778, %v787
    %v792 = vmul.f32 %v779, %v788
    %v793 = vmul.f32 %v780, %v789
    %794 = vrot.lane.b32.xlu0 %v107, 48
    %v795 = vpop.permute.xlu0 %794
    %797 = vrot.lane.b32.xlu0 %v104, 48
    %v798 = vpop.permute.xlu0 %797
    %799 = vrot.lane.b32.xlu0 %v105, 48
    %v800 = vpop.permute.xlu0 %799
    %801 = vrot.lane.b32.xlu0 %v106, 48
    %v802 = vpop.permute.xlu0 %801
    %vm803 = vcmask 392192
    %v804 = vsel %vm803, %v798, %v800
    %v805 = vsel %vm803, %v800, %v802
    %v806 = vsel %vm803, %v802, %v795
    %v811 = vsel %vm803, %v795, %v798
    %v812 = vperm.slane %v758, 1
    %v813 = vperm.slane %v759, 1
    %v814 = vperm.slane %v760, 1
    %v815 = vperm.slane %v761, 1
    %v816 = vmul.f32 %v811, %v812
    %v817 = vmul.f32 %v804, %v813
    %v818 = vmul.f32 %v805, %v814
    %v819 = vmul.f32 %v806, %v815
    %820 = vrot.lane.b32.xlu0 %v107, 45
    %v821 = vpop.permute.xlu0 %820
    %823 = vrot.lane.b32.xlu0 %v104, 45
    %v824 = vpop.permute.xlu0 %823
    %825 = vrot.lane.b32.xlu0 %v105, 45
    %v826 = vpop.permute.xlu0 %825
    %827 = vrot.lane.b32.xlu0 %v106, 45
    %v828 = vpop.permute.xlu0 %827
    %vm829 = vcmask 367616
    %v830 = vsel %vm829, %v824, %v826
    %v831 = vsel %vm829, %v826, %v828
    %v832 = vsel %vm829, %v828, %v821
    %v837 = vsel %vm829, %v821, %v824
    %v838 = vperm.slane %v758, 2
    %v839 = vperm.slane %v759, 2
    %v840 = vperm.slane %v760, 2
    %v841 = vperm.slane %v761, 2
    %v842 = vmul.f32 %v837, %v838
    %v843 = vmul.f32 %v830, %v839
    %v844 = vmul.f32 %v831, %v840
    %v845 = vmul.f32 %v832, %v841
    %846 = vrot.lane.b32.xlu0 %v107, 3
    %v847 = vpop.permute.xlu0 %846
    %849 = vrot.lane.b32.xlu0 %v104, 3
    %v850 = vpop.permute.xlu0 %849
    %851 = vrot.lane.b32.xlu0 %v105, 3
    %v852 = vpop.permute.xlu0 %851
    %853 = vrot.lane.b32.xlu0 %v106, 3
    %v854 = vpop.permute.xlu0 %853
    %vm855 = vcmask 23552
    %v856 = vsel %vm855, %v850, %v852
    %v857 = vsel %vm855, %v852, %v854
    %v858 = vsel %vm855, %v854, %v847
    %v863 = vsel %vm855, %v847, %v850
    %v864 = vperm.slane %v758, 3
    %v865 = vperm.slane %v759, 3
    %v866 = vperm.slane %v760, 3
    %v867 = vperm.slane %v761, 3
    %v868 = vmul.f32 %v863, %v864
    %v869 = vmul.f32 %v856, %v865
    %v870 = vmul.f32 %v857, %v866
    %v871 = vmul.f32 %v858, %v867
    %872 = vrot.lane.b32.xlu0 %v104, 125
    %v873 = vpop.permute.xlu0 %872
    %874 = vrot.lane.b32.xlu0 %v105, 125
    %v875 = vpop.permute.xlu0 %874
    %876 = vrot.lane.b32.xlu0 %v106, 125
    %v877 = vpop.permute.xlu0 %876
    %878 = vrot.lane.b32.xlu0 %v107, 125
    %v879 = vpop.permute.xlu0 %878
    %vm880 = vcmask 1022976
    %v881 = vsel %vm880, %v873, %v875
    %v882 = vsel %vm880, %v875, %v877
    %v883 = vsel %vm880, %v877, %v879
    %v889 = vsel %vm880, %v879, %v873
    %v890 = vperm.slane %v758, 5
    %v891 = vperm.slane %v759, 5
    %v892 = vperm.slane %v760, 5
    %v893 = vperm.slane %v761, 5
    %v894 = vmul.f32 %v881, %v890
    %v895 = vmul.f32 %v882, %v891
    %v896 = vmul.f32 %v883, %v892
    %v897 = vmul.f32 %v889, %v893
    %898 = vrot.lane.b32.xlu0 %v104, 83
    %v899 = vpop.permute.xlu0 %898
    %900 = vrot.lane.b32.xlu0 %v105, 83
    %v901 = vpop.permute.xlu0 %900
    %902 = vrot.lane.b32.xlu0 %v106, 83
    %v903 = vpop.permute.xlu0 %902
    %904 = vrot.lane.b32.xlu0 %v107, 83
    %v905 = vpop.permute.xlu0 %904
    %vm906 = vcmask 678912
    %v907 = vsel %vm906, %v899, %v901
    %v908 = vsel %vm906, %v901, %v903
    %v909 = vsel %vm906, %v903, %v905
    %v915 = vsel %vm906, %v905, %v899
    %v916 = vperm.slane %v758, 6
    %v917 = vperm.slane %v759, 6
    %v918 = vperm.slane %v760, 6
    %v919 = vperm.slane %v761, 6
    %v920 = vmul.f32 %v907, %v916
    %v921 = vmul.f32 %v908, %v917
    %v922 = vmul.f32 %v909, %v918
    %v923 = vmul.f32 %v915, %v919
    %924 = vrot.lane.b32.xlu0 %v104, 80
    %v925 = vpop.permute.xlu0 %924
    %926 = vrot.lane.b32.xlu0 %v105, 80
    %v927 = vpop.permute.xlu0 %926
    %928 = vrot.lane.b32.xlu0 %v106, 80
    %v929 = vpop.permute.xlu0 %928
    %930 = vrot.lane.b32.xlu0 %v107, 80
    %v931 = vpop.permute.xlu0 %930
    %vm932 = vcmask 654336
    %v933 = vsel %vm932, %v925, %v927
    %v934 = vsel %vm932, %v927, %v929
    %v935 = vsel %vm932, %v929, %v931
    %v941 = vsel %vm932, %v931, %v925
    %v942 = vperm.slane %v758, 7
    %v943 = vperm.slane %v759, 7
    %v944 = vperm.slane %v760, 7
    %v945 = vperm.slane %v761, 7
    %v946 = vmul.f32 %v933, %v942
    %v947 = vmul.f32 %v934, %v943
    %v948 = vmul.f32 %v935, %v944
    %v949 = vmul.f32 %v941, %v945
    %950 = vrot.lane.b32.xlu0 %v104, 77
    %v951 = vpop.permute.xlu0 %950
    %952 = vrot.lane.b32.xlu0 %v105, 77
    %v953 = vpop.permute.xlu0 %952
    %954 = vrot.lane.b32.xlu0 %v106, 77
    %v955 = vpop.permute.xlu0 %954
    %956 = vrot.lane.b32.xlu0 %v107, 77
    %v957 = vpop.permute.xlu0 %956
    %vm958 = vcmask 629760
    %v959 = vsel %vm958, %v951, %v953
    %v960 = vsel %vm958, %v953, %v955
    %v961 = vsel %vm958, %v955, %v957
    %v967 = vsel %vm958, %v957, %v951
    %v968 = vperm.slane %v762, 0
    %v969 = vperm.slane %v763, 0
    %v970 = vperm.slane %v764, 0
    %v971 = vperm.slane %v765, 0
    %v972 = vmul.f32 %v959, %v968
    %v973 = vmul.f32 %v960, %v969
    %v974 = vmul.f32 %v961, %v970
    %v975 = vmul.f32 %v967, %v971
    %v976 = vpack.c.bf16 %v816, %v790
    %v977 = vpack.c.bf16 %v817, %v791
    %v978 = vpack.c.bf16 %v818, %v792
    %v979 = vpack.c.bf16 %v819, %v793
    %v980 = vpack.c.bf16 %v868, %v842
    %v981 = vpack.c.bf16 %v869, %v843
    %v982 = vpack.c.bf16 %v870, %v844
    %v983 = vpack.c.bf16 %v871, %v845
    %v984 = vpack.c.bf16 %v894, %v104
    %v985 = vpack.c.bf16 %v895, %v105
    %v986 = vpack.c.bf16 %v896, %v106
    %v987 = vpack.c.bf16 %v897, %v107
    %v988 = vpack.c.bf16 %v946, %v920
    %v989 = vpack.c.bf16 %v947, %v921
    %v990 = vpack.c.bf16 %v948, %v922
    %v991 = vpack.c.bf16 %v949, %v923
    %v992 = vpack.c.bf16 %v972, %v972
    %v993 = vpack.c.bf16 %v973, %v973
    %v994 = vpack.c.bf16 %v974, %v974
    %v995 = vpack.c.bf16 %v975, %v975
    %997 = vset.pattern.permute.xlu0 0
    %998 = vperm.xlu0 %997, %v767
    %v999 = vpop.permute.xlu0 %998
    %v1002 = vsel %vm355, %v766, 0
    %v1005 = vsel %vm359, %v992, 0
    %v1008 = vsel %vm359, %v993, 0
    %v1011 = vsel %vm359, %v994, 0
    %v1014 = vsel %vm359, %v995, 0
    %1016 = vmatpush.bf16.msra.mxu0 0
    %1017 = vmatpush.bf16.msra.mxu0 0
    %1018 = vmatpush.bf16.msra.mxu0 0
    %1019 = vmatpush.bf16.msra.mxu0 %v1005
    %1020 = vmatpush.bf16.msra.mxu0 %v988
    %1021 = vmatpush.bf16.msra.mxu0 %v984
    %1022 = vmatpush.bf16.msra.mxu0 %v980
    %1023 = vmatpush.bf16.msra.mxu0 %v976
    %1024 = vmatmul.bf16.gmra.mxu0 %v1002
    %v1025 = vpop.f32.mrf.mxu0
    %v1026 = vadd.f32 %v999, %v1025
    %v1027 = vpop.f32.mrf.mxu0
    %1028 = vdwg.mxu0
    %1029 = vmatpush.bf16.msra.mxu0 0
    %1030 = vmatpush.bf16.msra.mxu0 0
    %1031 = vmatpush.bf16.msra.mxu0 0
    %1032 = vmatpush.bf16.msra.mxu0 %v1008
    %1033 = vmatpush.bf16.msra.mxu0 %v989
    %1034 = vmatpush.bf16.msra.mxu0 %v985
    %1035 = vmatpush.bf16.msra.mxu0 %v981
    %1036 = vmatpush.bf16.msra.mxu0 %v977
    %1037 = vmatmul.bf16.gmra.mxu0 %v1002
    %v1038 = vpop.f32.mrf.mxu0
    %v1039 = vadd.f32 %v999, %v1038
    %v1040 = vpop.f32.mrf.mxu0
    %1041 = vdwg.mxu0
    %1042 = vmatpush.bf16.msra.mxu0 0
    %1043 = vmatpush.bf16.msra.mxu0 0
    %1044 = vmatpush.bf16.msra.mxu0 0
    %1045 = vmatpush.bf16.msra.mxu0 %v1011
    %1046 = vmatpush.bf16.msra.mxu0 %v990
    %1047 = vmatpush.bf16.msra.mxu0 %v986
    %1048 = vmatpush.bf16.msra.mxu0 %v982
    %1049 = vmatpush.bf16.msra.mxu0 %v978
    %1050 = vmatmul.bf16.gmra.mxu0 %v1002
    %v1051 = vpop.f32.mrf.mxu0
    %v1052 = vadd.f32 %v999, %v1051
    %v1053 = vpop.f32.mrf.mxu0
    %1054 = vdwg.mxu0
    %1055 = vmatpush.bf16.msra.mxu0 0
    %1056 = vmatpush.bf16.msra.mxu0 0
    %1057 = vmatpush.bf16.msra.mxu0 0
    %1058 = vmatpush.bf16.msra.mxu0 %v1014
    %1059 = vmatpush.bf16.msra.mxu0 %v991
    %1060 = vmatpush.bf16.msra.mxu0 %v987
    %1061 = vmatpush.bf16.msra.mxu0 %v983
    %1062 = vmatpush.bf16.msra.mxu0 %v979
    %1063 = vmatmul.bf16.gmra.mxu0 %v1002
    %v1064 = vpop.f32.mrf.mxu0
    %v1065 = vadd.f32 %v999, %v1064
    %v1066 = vpop.f32.mrf.mxu0
    %1067 = vdwg.mxu0
    %vm1068 = vcmp.ge.f32.partialorder %v1026, 0.0
    %vm1069 = vcmp.ge.f32.partialorder %v1039, 0.0
    %vm1070 = vcmp.ge.f32.partialorder %v1052, 0.0
    %vm1071 = vcmp.ge.f32.partialorder %v1065, 0.0
    %v1072 = vmul.f32 %v1026, 0.2
    %v1073 = vmul.f32 %v1039, 0.2
    %v1074 = vmul.f32 %v1052, 0.2
    %v1075 = vmul.f32 %v1065, 0.2
    %v1076 = vsel %vm1068, %v1026, %v1072
    %v1077 = vsel %vm1069, %v1039, %v1073
    %v1078 = vsel %vm1070, %v1052, %v1074
    %v1079 = vsel %vm1071, %v1065, %v1075
    %v1080 = vld [vmem:[%s10] sm:$0xf]
    %v1081 = vpack.c.bf16 %v432, %v432
    %v1082 = vpack.c.bf16 %v433, %v433
    %v1083 = vpack.c.bf16 %v434, %v434
    %v1084 = vpack.c.bf16 %v435, %v435
    %v1085 = vpack.c.bf16 %v754, %v754
    %v1086 = vpack.c.bf16 %v755, %v755
    %v1087 = vpack.c.bf16 %v756, %v756
    %v1088 = vpack.c.bf16 %v757, %v757
    %v1090 = vunpack.c.l.b16 %v1080
    %v1091 = vpack.c.b16 %v1090, %v1090
    %1092 = vrot.lane.b32.xlu0 %v1091, 120
    %v1093 = vpop.permute.xlu0 %1092
    %vm1094 = vcmask 64512
    %v1096 = vsel %vm1094, %v1093, 0
    %v1099 = vsel %vm359, %v1085, 0
    %v1102 = vsel %vm359, %v1086, 0
    %v1105 = vsel %vm359, %v1087, 0
    %v1108 = vsel %vm359, %v1088, 0
    %1110 = vmatpush.bf16.msra.mxu0 0
    %1111 = vmatpush.bf16.msra.mxu0 0
    %1112 = vmatpush.bf16.msra.mxu0 0
    %1113 = vmatpush.bf16.msra.mxu0 0
    %1114 = vmatpush.bf16.msra.mxu0 0
    %1115 = vmatpush.bf16.msra.mxu0 0
    %1116 = vmatpush.bf16.msra.mxu0 0
    %1117 = vmatpush.bf16.msra.mxu0 %v1099
    %1118 = vmatmul.bf16.gmra.mxu0 %v1096
    %v1119 = vpop.f32.mrf.mxu0
    %v1120 = vadd.f32 0.0, %v1119
    %v1121 = vpop.f32.mrf.mxu0
    %1122 = vdwg.mxu0
    %1123 = vmatpush.bf16.msra.mxu0 0
    %1124 = vmatpush.bf16.msra.mxu0 0
    %1125 = vmatpush.bf16.msra.mxu0 0
    %1126 = vmatpush.bf16.msra.mxu0 0
    %1127 = vmatpush.bf16.msra.mxu0 0
    %1128 = vmatpush.bf16.msra.mxu0 0
    %1129 = vmatpush.bf16.msra.mxu0 0
    %1130 = vmatpush.bf16.msra.mxu0 %v1102
    %1131 = vmatmul.bf16.gmra.mxu0 %v1096
    %v1132 = vpop.f32.mrf.mxu0
    %v1133 = vadd.f32 0.0, %v1132
    %v1134 = vpop.f32.mrf.mxu0
    %1135 = vdwg.mxu0
    %1136 = vmatpush.bf16.msra.mxu0 0
    %1137 = vmatpush.bf16.msra.mxu0 0
    %1138 = vmatpush.bf16.msra.mxu0 0
    %1139 = vmatpush.bf16.msra.mxu0 0
    %1140 = vmatpush.bf16.msra.mxu0 0
    %1141 = vmatpush.bf16.msra.mxu0 0
    %1142 = vmatpush.bf16.msra.mxu0 0
    %1143 = vmatpush.bf16.msra.mxu0 %v1105
    %1144 = vmatmul.bf16.gmra.mxu0 %v1096
    %v1145 = vpop.f32.mrf.mxu0
    %v1146 = vadd.f32 0.0, %v1145
    %v1147 = vpop.f32.mrf.mxu0
    %1148 = vdwg.mxu0
    %1149 = vmatpush.bf16.msra.mxu0 0
    %1150 = vmatpush.bf16.msra.mxu0 0
    %1151 = vmatpush.bf16.msra.mxu0 0
    %1152 = vmatpush.bf16.msra.mxu0 0
    %1153 = vmatpush.bf16.msra.mxu0 0
    %1154 = vmatpush.bf16.msra.mxu0 0
    %1155 = vmatpush.bf16.msra.mxu0 0
    %1156 = vmatpush.bf16.msra.mxu0 %v1108
    %1157 = vmatmul.bf16.gmra.mxu0 %v1096
    %v1158 = vpop.f32.mrf.mxu0
    %v1159 = vadd.f32 0.0, %v1158
    %v1160 = vpop.f32.mrf.mxu0
    %1161 = vdwg.mxu0
    %v1163 = vsel %vm1094, %v1080, 0
    %v1166 = vsel %vm359, %v1081, 0
    %v1169 = vsel %vm359, %v1082, 0
    %v1172 = vsel %vm359, %v1083, 0
    %v1175 = vsel %vm359, %v1084, 0
    %1177 = vmatpush.bf16.msra.mxu0 0
    %1178 = vmatpush.bf16.msra.mxu0 0
    %1179 = vmatpush.bf16.msra.mxu0 0
    %1180 = vmatpush.bf16.msra.mxu0 0
    %1181 = vmatpush.bf16.msra.mxu0 0
    %1182 = vmatpush.bf16.msra.mxu0 0
    %1183 = vmatpush.bf16.msra.mxu0 0
    %1184 = vmatpush.bf16.msra.mxu0 %v1166
    %1185 = vmatmul.bf16.gmra.mxu0 %v1163
    %v1186 = vpop.f32.mrf.mxu0
    %v1187 = vadd.f32 %v1120, %v1186
    %v1188 = vpop.f32.mrf.mxu0
    %1189 = vdwg.mxu0
    %1190 = vmatpush.bf16.msra.mxu0 0
    %1191 = vmatpush.bf16.msra.mxu0 0
    %1192 = vmatpush.bf16.msra.mxu0 0
    %1193 = vmatpush.bf16.msra.mxu0 0
    %1194 = vmatpush.bf16.msra.mxu0 0
    %1195 = vmatpush.bf16.msra.mxu0 0
    %1196 = vmatpush.bf16.msra.mxu0 0
    %1197 = vmatpush.bf16.msra.mxu0 %v1169
    %1198 = vmatmul.bf16.gmra.mxu0 %v1163
    %v1199 = vpop.f32.mrf.mxu0
    %v1200 = vadd.f32 %v1133, %v1199
    %v1201 = vpop.f32.mrf.mxu0
    %1202 = vdwg.mxu0
    %1203 = vmatpush.bf16.msra.mxu0 0
    %1204 = vmatpush.bf16.msra.mxu0 0
    %1205 = vmatpush.bf16.msra.mxu0 0
    %1206 = vmatpush.bf16.msra.mxu0 0
    %1207 = vmatpush.bf16.msra.mxu0 0
    %1208 = vmatpush.bf16.msra.mxu0 0
    %1209 = vmatpush.bf16.msra.mxu0 0
    %1210 = vmatpush.bf16.msra.mxu0 %v1172
    %1211 = vmatmul.bf16.gmra.mxu0 %v1163
    %v1212 = vpop.f32.mrf.mxu0
    %v1213 = vadd.f32 %v1146, %v1212
    %v1214 = vpop.f32.mrf.mxu0
    %1215 = vdwg.mxu0
    %1216 = vmatpush.bf16.msra.mxu0 0
    %1217 = vmatpush.bf16.msra.mxu0 0
    %1218 = vmatpush.bf16.msra.mxu0 0
    %1219 = vmatpush.bf16.msra.mxu0 0
    %1220 = vmatpush.bf16.msra.mxu0 0
    %1221 = vmatpush.bf16.msra.mxu0 0
    %1222 = vmatpush.bf16.msra.mxu0 0
    %1223 = vmatpush.bf16.msra.mxu0 %v1175
    %1224 = vmatmul.bf16.gmra.mxu0 %v1163
    %v1225 = vpop.f32.mrf.mxu0
    %v1226 = vadd.f32 %v1159, %v1225
    %v1227 = vpop.f32.mrf.mxu0
    %1228 = vdwg.mxu0
    %v1229 = vpack.c.bf16 %v1076, %v1076
    %v1230 = vpack.c.bf16 %v1077, %v1077
    %v1231 = vpack.c.bf16 %v1078, %v1078
    %v1232 = vpack.c.bf16 %v1079, %v1079
    %1233 = vrot.lane.b32.xlu0 %v1091, 112
    %v1234 = vpop.permute.xlu0 %1233
    %v1236 = vsel %vm1094, %v1234, 0
    %v1239 = vsel %vm359, %v1229, 0
    %v1242 = vsel %vm359, %v1230, 0
    %v1245 = vsel %vm359, %v1231, 0
    %v1248 = vsel %vm359, %v1232, 0
    %1250 = vmatpush.bf16.msra.mxu0 0
    %1251 = vmatpush.bf16.msra.mxu0 0
    %1252 = vmatpush.bf16.msra.mxu0 0
    %1253 = vmatpush.bf16.msra.mxu0 0
    %1254 = vmatpush.bf16.msra.mxu0 0
    %1255 = vmatpush.bf16.msra.mxu0 0
    %1256 = vmatpush.bf16.msra.mxu0 0
    %1257 = vmatpush.bf16.msra.mxu0 %v1239
    %1258 = vmatmul.bf16.gmra.mxu0 %v1236
    %v1259 = vpop.f32.mrf.mxu0
    %v1260 = vadd.f32 0.0, %v1259
    %v1261 = vpop.f32.mrf.mxu0
    %1262 = vdwg.mxu0
    %1263 = vmatpush.bf16.msra.mxu0 0
    %1264 = vmatpush.bf16.msra.mxu0 0
    %1265 = vmatpush.bf16.msra.mxu0 0
    %1266 = vmatpush.bf16.msra.mxu0 0
    %1267 = vmatpush.bf16.msra.mxu0 0
    %1268 = vmatpush.bf16.msra.mxu0 0
    %1269 = vmatpush.bf16.msra.mxu0 0
    %1270 = vmatpush.bf16.msra.mxu0 %v1242
    %1271 = vmatmul.bf16.gmra.mxu0 %v1236
    %v1272 = vpop.f32.mrf.mxu0
    %v1273 = vadd.f32 0.0, %v1272
    %v1274 = vpop.f32.mrf.mxu0
    %1275 = vdwg.mxu0
    %1276 = vmatpush.bf16.msra.mxu0 0
    %1277 = vmatpush.bf16.msra.mxu0 0
    %1278 = vmatpush.bf16.msra.mxu0 0
    %1279 = vmatpush.bf16.msra.mxu0 0
    %1280 = vmatpush.bf16.msra.mxu0 0
    %1281 = vmatpush.bf16.msra.mxu0 0
    %1282 = vmatpush.bf16.msra.mxu0 0
    %1283 = vmatpush.bf16.msra.mxu0 %v1245
    %1284 = vmatmul.bf16.gmra.mxu0 %v1236
    %v1285 = vpop.f32.mrf.mxu0
    %v1286 = vadd.f32 0.0, %v1285
    %v1287 = vpop.f32.mrf.mxu0
    %1288 = vdwg.mxu0
    %1289 = vmatpush.bf16.msra.mxu0 0
    %1290 = vmatpush.bf16.msra.mxu0 0
    %1291 = vmatpush.bf16.msra.mxu0 0
    %1292 = vmatpush.bf16.msra.mxu0 0
    %1293 = vmatpush.bf16.msra.mxu0 0
    %1294 = vmatpush.bf16.msra.mxu0 0
    %1295 = vmatpush.bf16.msra.mxu0 0
    %1296 = vmatpush.bf16.msra.mxu0 %v1248
    %1297 = vmatmul.bf16.gmra.mxu0 %v1236
    %v1298 = vpop.f32.mrf.mxu0
    %v1299 = vadd.f32 0.0, %v1298
    %v1300 = vpop.f32.mrf.mxu0
    %1301 = vdwg.mxu0
    %v1302 = vadd.f32 %v1187, %v1260
    %v1303 = vadd.f32 %v1200, %v1273
    %v1304 = vadd.f32 %v1213, %v1286
    %v1305 = vadd.f32 %v1226, %v1299
    %v1306 = vld [vmem:[%s11] sm:$0xff]
    %1308 = vset.pattern.permute.xlu0 0
    %1309 = vperm.xlu0 %1308, %v1306
    %v1310 = vpop.permute.xlu0 %1309
    %v1312 = vadd.f32 %v1302, %v1310
    %v1313 = vadd.f32 %v1303, %v1310
    %v1314 = vadd.f32 %v1304, %v1310
    %v1315 = vadd.f32 %v1305, %v1310
    %1316 = vst [vmem:[#allocation10] sm:$0xff] %v1312
    %1317 = vst [vmem:[#allocation10 + $0x8] sm:$0xff] %v1313
    %1318 = vst [vmem:[#allocation10 + $0x10] sm:$0xff] %v1314
    %1319 = vst [vmem:[#allocation10 + $0x18] sm:$0xff] %v1315
    // Predicated region
    $region66: #{tpu_custom_call.1} parent=1 // pred_check
      _
    $region67: #{tpu_custom_call.1} parent=1 // pred_check_branch
      %1321 = sbr.rel (0) target = $region69
    $region68: #{tpu_custom_call.1} parent=1 // pred_region
      %1323 = vsyncadd [#allocation4], 0
      %s1325 = sshll.u32 [#allocation10], 4
      %s1326 = int_to_ptr.vmem [resolvable:$true] %s1325
      %s1327 = sshll.u32 %s12, 4
      %s1328 = int_to_ptr.hbm [resolvable:$true] %s1327
      %1330 = dma.vmem_to_hbm [thread:$0]  %s1326, 512, %s1328, [#allocation4]
    $region69: #{tpu_custom_call.1} parent=1 // pred_fallthru
      _
    // Predicated region
    $region70: #{tpu_custom_call.1} parent=1 // pred_check
      _
    $region71: #{tpu_custom_call.1} parent=1 // pred_check_branch
      %1332 = sbr.rel (0) target = $region73
    $region72: #{tpu_custom_call.1} parent=1 // pred_region
      %1334 = dma.done [#allocation4], 512
    $region73: #{tpu_custom_call.1} parent=1 // pred_fallthru
      _
    %1335 = vsyncpa [#allocation3], 1
    %1336 = vsyncpa [#allocation6], 1
    %1337 = vsyncpa [#allocation9], 1
    %1338 = vsyncpa [#allocation4], 1

</llo_original>
